<compile_context>
chip_gen: v7x
topology: tpu7x:2x2x1
jax: 0.10.0
libtpu: 0.0.40
codegen_flags: <defaults>
</compile_context>

<pallas_src>
import jax
import jax.numpy as jnp
from jax import lax
from jax.experimental import pallas as pl
from jax.experimental.pallas import tpu as pltpu


def lstm_corr_kernel(x_ref, w_ih_ref, w_hh_ref, b_ref,
                     w_lin_z_ref, w_lin_c_ref, b_lin_ref,
                     out_ref, z_scratch):
    """Single-program kernel: LSTM recurrence + z@z.T + row-normalize + linear.

    x_ref:       (N, T)   input sequence, bf16 (seq_len N, feature/hidden T)
    w_ih_ref:    (T, 4T)  transposed weight_ih_l0, bf16
    w_hh_ref:    (T, 4T)  transposed weight_hh_l0, bf16
    b_ref:       (1, 4T)  bias_ih_l0 + bias_hh_l0, f32
    w_lin_z_ref: (T, 1)   linear weight slice acting on z, f32
    w_lin_c_ref: (N, 1)   linear weight slice acting on corr, f32
    b_lin_ref:   (1, 1)   linear bias, f32, in SMEM
    out_ref:     (N, 1)   prediction, f32
    z_scratch:   (N, T)   VMEM scratch holding the LSTM hidden states
    """
    N, T = x_ref.shape

    # ---- hoisted input projection: one MXU matmul, bias folded in ----------
    x_gates = (jnp.dot(x_ref[...], w_ih_ref[...],
                       preferred_element_type=jnp.float32)
               + b_ref[...])                                  # (N, 4T) f32

    w_hh = w_hh_ref[...]                                      # (T, 4T) bf16

    h = jnp.zeros((1, T), jnp.float32)
    c = jnp.zeros((1, T), jnp.float32)

    # ---- fully unrolled recurrence (N is static and small) -----------------
    # Gate order matches PyTorch nn.LSTM: i, f, g, o.
    for t in range(N):
        hg = jnp.dot(h.astype(jnp.bfloat16), w_hh,
                     preferred_element_type=jnp.float32)      # (1, 4T)
        gates = x_gates[t:t + 1, :] + hg                      # (1, 4T)

        # Two full-width EUP passes instead of four sliced activations.
        sig = jax.nn.sigmoid(gates)
        tnh = jnp.tanh(gates)
        i_g = sig[:, 0 * T:1 * T]
        f_g = sig[:, 1 * T:2 * T]
        g_g = tnh[:, 2 * T:3 * T]
        o_g = sig[:, 3 * T:4 * T]

        c = f_g * c + i_g * g_g
        h = o_g * jnp.tanh(c)
        z_scratch[pl.ds(t, 1), :] = h                         # static row store

    z = z_scratch[...]                                        # (N, T) f32

    # correlation_matrix = F.normalize(z @ z.T, dim=1)  (p=2, eps=1e-12)
    corr = jnp.dot(z, z.T, preferred_element_type=jnp.float32)   # (N, N)
    row_norm = jnp.sqrt(jnp.sum(corr * corr, axis=1, keepdims=True))
    corr = corr / jnp.maximum(row_norm, 1e-12)

    # Linear(concat([z, corr], 1)) == z @ Wz + corr @ Wc + b  (concat-free)
    pred = (jnp.dot(z, w_lin_z_ref[...], preferred_element_type=jnp.float32)
            + jnp.dot(corr, w_lin_c_ref[...], preferred_element_type=jnp.float32)
            + b_lin_ref[0, 0])
    out_ref[...] = pred


def lstm_correlation_forward(x, params):
    """Wrapper: layout plumbing (transpose / cast / reshape) + pallas_call."""
    N, T = x.shape
    x_bf16 = x.astype(jnp.bfloat16)
    w_ih_t = params["w_ih"].T.astype(jnp.bfloat16)          # (T, 4T)
    w_hh_t = params["w_hh"].T.astype(jnp.bfloat16)          # (T, 4T)
    b = (params["b_ih"] + params["b_hh"]).reshape(1, 4 * T).astype(jnp.float32)
    w_lin_z = params["w_lin"][:, :T].T                       # (T, 1)
    w_lin_c = params["w_lin"][:, T:].T                       # (N, 1)
    b_lin = params["b_lin"].reshape(1, 1).astype(jnp.float32)

    vmem = pl.BlockSpec(memory_space=pltpu.MemorySpace.VMEM)
    smem = pl.BlockSpec(memory_space=pltpu.MemorySpace.SMEM)
    return pl.pallas_call(
        lstm_corr_kernel,
        out_shape=jax.ShapeDtypeStruct((N, 1), jnp.float32),
        grid_spec=pltpu.PrefetchScalarGridSpec(
            num_scalar_prefetch=0,
            grid=(),
            in_specs=[vmem, vmem, vmem, vmem, vmem, vmem, smem],
            out_specs=vmem,
            scratch_shapes=[pltpu.VMEM((N, T), jnp.float32)],
        ),
    )(x_bf16, w_ih_t, w_hh_t, b, w_lin_z, w_lin_c, b_lin)


def make_params(key, time_window, num_point):
    """Deterministic parameter init mirroring PyTorch default U(-1/sqrt(k), 1/sqrt(k))."""
    T, N = time_window, num_point
    k_lstm = 1.0 / jnp.sqrt(jnp.float32(T))
    k_lin = 1.0 / jnp.sqrt(jnp.float32(T + N))
    ks = jax.random.split(key, 6)
    return {
        "w_ih": jax.random.uniform(ks[0], (4 * T, T), jnp.float32, -k_lstm, k_lstm),
        "w_hh": jax.random.uniform(ks[1], (4 * T, T), jnp.float32, -k_lstm, k_lstm),
        "b_ih": jax.random.uniform(ks[2], (4 * T,), jnp.float32, -k_lstm, k_lstm),
        "b_hh": jax.random.uniform(ks[3], (4 * T,), jnp.float32, -k_lstm, k_lstm),
        "w_lin": jax.random.uniform(ks[4], (1, T + N), jnp.float32, -k_lin, k_lin),
        "b_lin": jax.random.uniform(ks[5], (1,), jnp.float32, -k_lin, k_lin),
    }


def reference_forward(x, params):
    """Pure-JAX reference (matches PyTorch semantics) for correctness check."""
    T = params["w_ih"].shape[1]

    def step(carry, x_t):
        h, c = carry
        gates = (x_t @ params["w_ih"].T + h @ params["w_hh"].T
                 + params["b_ih"] + params["b_hh"])
        i_g, f_g, g_g, o_g = jnp.split(gates, 4)
        i_g = jax.nn.sigmoid(i_g)
        f_g = jax.nn.sigmoid(f_g)
        g_g = jnp.tanh(g_g)
        o_g = jax.nn.sigmoid(o_g)
        c = f_g * c + i_g * g_g
        h = o_g * jnp.tanh(c)
        return (h, c), h

    (_, _), z = lax.scan(step, (jnp.zeros(T), jnp.zeros(T)), x)
    corr = z @ z.T
    corr = corr / jnp.maximum(
        jnp.sqrt(jnp.sum(corr * corr, axis=1, keepdims=True)), 1e-12)
    zc = jnp.concatenate([z, corr], axis=1)
    return zc @ params["w_lin"].T + params["b_lin"]


if __name__ == "__main__":
    time_window = 32   # LSTM input/hidden size
    num_point = 16     # sequence length

    key = jax.random.PRNGKey(0)
    k_x, k_p = jax.random.split(key)
    x = jax.random.normal(k_x, (num_point, time_window), jnp.float32)
    params = make_params(k_p, time_window, num_point)

    pred = lstm_correlation_forward(x, params)
    pred = jax.block_until_ready(pred)

    ref = reference_forward(x, params)
    assert pred.shape == (num_point, 1)
    assert jnp.allclose(pred, ref, atol=5e-2, rtol=5e-2), (
        f"mismatch: max abs err {jnp.max(jnp.abs(pred - ref))}")

    print("KERNEL_OK")
</pallas_src>

<mosaic_0001>
module attributes {stable_mosaic.version = 11 : i64} {
  func.func @lstm_corr_kernel(%arg0: memref<16x32xbf16, #tpu.memory_space<vmem>>, %arg1: memref<32x128xbf16, #tpu.memory_space<vmem>>, %arg2: memref<32x128xbf16, #tpu.memory_space<vmem>>, %arg3: memref<1x128xf32, #tpu.memory_space<vmem>>, %arg4: memref<32x1xf32, #tpu.memory_space<vmem>>, %arg5: memref<16x1xf32, #tpu.memory_space<vmem>>, %arg6: memref<1x1xf32, #tpu.memory_space<smem>>, %arg7: memref<16x1xf32, #tpu.memory_space<vmem>>, %arg8: memref<16x32xf32, #tpu.memory_space<vmem>>) attributes {dimension_semantics = [], scalar_prefetch = 0 : i64, scratch_operands = 1 : i64, tpu.core_type = #tpu.core_type<tc>} {
    %c0 = arith.constant 0 : index
    %c0_0 = arith.constant 0 : index
    %0 = vector.load %arg0[%c0, %c0_0] : memref<16x32xbf16, #tpu.memory_space<vmem>>, vector<16x32xbf16>
    %c0_1 = arith.constant 0 : index
    %c0_2 = arith.constant 0 : index
    %1 = vector.load %arg1[%c0_1, %c0_2] : memref<32x128xbf16, #tpu.memory_space<vmem>>, vector<32x128xbf16>
    %cst = arith.constant dense<0.000000e+00> : vector<16x128xf32>
    %2 = tpu.matmul %0, %1, %cst {dimension_numbers = #tpu.dot_dimension_numbers<[1], [0], [0], [1], [0, 0, 1, 1], [], []>} : vector<16x32xbf16>, vector<32x128xbf16>, vector<16x128xf32> -> vector<16x128xf32>
    %c0_3 = arith.constant 0 : index
    %c0_4 = arith.constant 0 : index
    %3 = vector.load %arg3[%c0_3, %c0_4] : memref<1x128xf32, #tpu.memory_space<vmem>>, vector<1x128xf32>
    %4 = vector.broadcast %3 : vector<1x128xf32> to vector<16x128xf32>
    %5 = arith.addf %2, %4 : vector<16x128xf32>
    %c0_5 = arith.constant 0 : index
    %c0_6 = arith.constant 0 : index
    %6 = vector.load %arg2[%c0_5, %c0_6] : memref<32x128xbf16, #tpu.memory_space<vmem>>, vector<32x128xbf16>
    %cst_7 = arith.constant 0.000000e+00 : f32
    %7 = vector.broadcast %cst_7 : f32 to vector<1x32xf32>
    %cst_8 = arith.constant 0.000000e+00 : f32
    %8 = vector.broadcast %cst_8 : f32 to vector<1x32xf32>
    %9 = arith.truncf %7 : vector<1x32xf32> to vector<1x32xbf16>
    %cst_9 = arith.constant dense<0.000000e+00> : vector<1x128xf32>
    %10 = tpu.matmul %9, %6, %cst_9 {dimension_numbers = #tpu.dot_dimension_numbers<[1], [0], [0], [1], [0, 0, 1, 1], [], []>} : vector<1x32xbf16>, vector<32x128xbf16>, vector<1x128xf32> -> vector<1x128xf32>
    %11 = vector.extract_strided_slice %5 {offsets = [0, 0], sizes = [1, 128], strides = [1, 1]} : vector<16x128xf32> to vector<1x128xf32>
    %12 = arith.addf %11, %10 : vector<1x128xf32>
    %13 = arith.negf %12 : vector<1x128xf32>
    %14 = math.exp %13 : vector<1x128xf32>
    %cst_10 = arith.constant 1.000000e+00 : f32
    %15 = vector.broadcast %cst_10 : f32 to vector<1x128xf32>
    %16 = arith.addf %15, %14 : vector<1x128xf32>
    %17 = arith.divf %15, %16 : vector<1x128xf32>
    %18 = math.tanh %12 : vector<1x128xf32>
    %19 = vector.extract_strided_slice %17 {offsets = [0, 0], sizes = [1, 32], strides = [1, 1]} : vector<1x128xf32> to vector<1x32xf32>
    %20 = vector.extract_strided_slice %17 {offsets = [0, 32], sizes = [1, 32], strides = [1, 1]} : vector<1x128xf32> to vector<1x32xf32>
    %21 = vector.extract_strided_slice %18 {offsets = [0, 64], sizes = [1, 32], strides = [1, 1]} : vector<1x128xf32> to vector<1x32xf32>
    %22 = vector.extract_strided_slice %17 {offsets = [0, 96], sizes = [1, 32], strides = [1, 1]} : vector<1x128xf32> to vector<1x32xf32>
    %23 = arith.mulf %20, %8 : vector<1x32xf32>
    %24 = arith.mulf %19, %21 : vector<1x32xf32>
    %25 = arith.addf %23, %24 : vector<1x32xf32>
    %26 = math.tanh %25 : vector<1x32xf32>
    %27 = arith.mulf %22, %26 : vector<1x32xf32>
    %c0_11 = arith.constant 0 : index
    %c0_12 = arith.constant 0 : index
    %28 = vector.load %arg8[%c0_11, %c0_12] : memref<16x32xf32, #tpu.memory_space<vmem>>, vector<1x32xf32>
    tpu.vector_store %arg8[%c0_11, %c0_12], %27 {strides = array<i32>} : memref<16x32xf32, #tpu.memory_space<vmem>>, vector<1x32xf32>,
    %29 = arith.truncf %27 : vector<1x32xf32> to vector<1x32xbf16>
    %cst_13 = arith.constant dense<0.000000e+00> : vector<1x128xf32>
    %30 = tpu.matmul %29, %6, %cst_13 {dimension_numbers = #tpu.dot_dimension_numbers<[1], [0], [0], [1], [0, 0, 1, 1], [], []>} : vector<1x32xbf16>, vector<32x128xbf16>, vector<1x128xf32> -> vector<1x128xf32>
    %31 = vector.extract_strided_slice %5 {offsets = [1, 0], sizes = [1, 128], strides = [1, 1]} : vector<16x128xf32> to vector<1x128xf32>
    %32 = arith.addf %31, %30 : vector<1x128xf32>
    %33 = arith.negf %32 : vector<1x128xf32>
    %34 = math.exp %33 : vector<1x128xf32>
    %cst_14 = arith.constant 1.000000e+00 : f32
    %35 = vector.broadcast %cst_14 : f32 to vector<1x128xf32>
    %36 = arith.addf %35, %34 : vector<1x128xf32>
    %37 = arith.divf %35, %36 : vector<1x128xf32>
    %38 = math.tanh %32 : vector<1x128xf32>
    %39 = vector.extract_strided_slice %37 {offsets = [0, 0], sizes = [1, 32], strides = [1, 1]} : vector<1x128xf32> to vector<1x32xf32>
    %40 = vector.extract_strided_slice %37 {offsets = [0, 32], sizes = [1, 32], strides = [1, 1]} : vector<1x128xf32> to vector<1x32xf32>
    %41 = vector.extract_strided_slice %38 {offsets = [0, 64], sizes = [1, 32], strides = [1, 1]} : vector<1x128xf32> to vector<1x32xf32>
    %42 = vector.extract_strided_slice %37 {offsets = [0, 96], sizes = [1, 32], strides = [1, 1]} : vector<1x128xf32> to vector<1x32xf32>
    %43 = arith.mulf %40, %25 : vector<1x32xf32>
    %44 = arith.mulf %39, %41 : vector<1x32xf32>
    %45 = arith.addf %43, %44 : vector<1x32xf32>
    %46 = math.tanh %45 : vector<1x32xf32>
    %47 = arith.mulf %42, %46 : vector<1x32xf32>
    %c1 = arith.constant 1 : index
    %c0_15 = arith.constant 0 : index
    %48 = vector.load %arg8[%c1, %c0_15] : memref<16x32xf32, #tpu.memory_space<vmem>>, vector<1x32xf32>
    tpu.vector_store %arg8[%c1, %c0_15], %47 {strides = array<i32>} : memref<16x32xf32, #tpu.memory_space<vmem>>, vector<1x32xf32>,
    %49 = arith.truncf %47 : vector<1x32xf32> to vector<1x32xbf16>
    %cst_16 = arith.constant dense<0.000000e+00> : vector<1x128xf32>
    %50 = tpu.matmul %49, %6, %cst_16 {dimension_numbers = #tpu.dot_dimension_numbers<[1], [0], [0], [1], [0, 0, 1, 1], [], []>} : vector<1x32xbf16>, vector<32x128xbf16>, vector<1x128xf32> -> vector<1x128xf32>
    %51 = vector.extract_strided_slice %5 {offsets = [2, 0], sizes = [1, 128], strides = [1, 1]} : vector<16x128xf32> to vector<1x128xf32>
    %52 = arith.addf %51, %50 : vector<1x128xf32>
    %53 = arith.negf %52 : vector<1x128xf32>
    %54 = math.exp %53 : vector<1x128xf32>
    %cst_17 = arith.constant 1.000000e+00 : f32
    %55 = vector.broadcast %cst_17 : f32 to vector<1x128xf32>
    %56 = arith.addf %55, %54 : vector<1x128xf32>
    %57 = arith.divf %55, %56 : vector<1x128xf32>
    %58 = math.tanh %52 : vector<1x128xf32>
    %59 = vector.extract_strided_slice %57 {offsets = [0, 0], sizes = [1, 32], strides = [1, 1]} : vector<1x128xf32> to vector<1x32xf32>
    %60 = vector.extract_strided_slice %57 {offsets = [0, 32], sizes = [1, 32], strides = [1, 1]} : vector<1x128xf32> to vector<1x32xf32>
    %61 = vector.extract_strided_slice %58 {offsets = [0, 64], sizes = [1, 32], strides = [1, 1]} : vector<1x128xf32> to vector<1x32xf32>
    %62 = vector.extract_strided_slice %57 {offsets = [0, 96], sizes = [1, 32], strides = [1, 1]} : vector<1x128xf32> to vector<1x32xf32>
    %63 = arith.mulf %60, %45 : vector<1x32xf32>
    %64 = arith.mulf %59, %61 : vector<1x32xf32>
    %65 = arith.addf %63, %64 : vector<1x32xf32>
    %66 = math.tanh %65 : vector<1x32xf32>
    %67 = arith.mulf %62, %66 : vector<1x32xf32>
    %c2 = arith.constant 2 : index
    %c0_18 = arith.constant 0 : index
    %68 = vector.load %arg8[%c2, %c0_18] : memref<16x32xf32, #tpu.memory_space<vmem>>, vector<1x32xf32>
    tpu.vector_store %arg8[%c2, %c0_18], %67 {strides = array<i32>} : memref<16x32xf32, #tpu.memory_space<vmem>>, vector<1x32xf32>,
    %69 = arith.truncf %67 : vector<1x32xf32> to vector<1x32xbf16>
    %cst_19 = arith.constant dense<0.000000e+00> : vector<1x128xf32>
    %70 = tpu.matmul %69, %6, %cst_19 {dimension_numbers = #tpu.dot_dimension_numbers<[1], [0], [0], [1], [0, 0, 1, 1], [], []>} : vector<1x32xbf16>, vector<32x128xbf16>, vector<1x128xf32> -> vector<1x128xf32>
    %71 = vector.extract_strided_slice %5 {offsets = [3, 0], sizes = [1, 128], strides = [1, 1]} : vector<16x128xf32> to vector<1x128xf32>
    %72 = arith.addf %71, %70 : vector<1x128xf32>
    %73 = arith.negf %72 : vector<1x128xf32>
    %74 = math.exp %73 : vector<1x128xf32>
    %cst_20 = arith.constant 1.000000e+00 : f32
    %75 = vector.broadcast %cst_20 : f32 to vector<1x128xf32>
    %76 = arith.addf %75, %74 : vector<1x128xf32>
    %77 = arith.divf %75, %76 : vector<1x128xf32>
    %78 = math.tanh %72 : vector<1x128xf32>
    %79 = vector.extract_strided_slice %77 {offsets = [0, 0], sizes = [1, 32], strides = [1, 1]} : vector<1x128xf32> to vector<1x32xf32>
    %80 = vector.extract_strided_slice %77 {offsets = [0, 32], sizes = [1, 32], strides = [1, 1]} : vector<1x128xf32> to vector<1x32xf32>
    %81 = vector.extract_strided_slice %78 {offsets = [0, 64], sizes = [1, 32], strides = [1, 1]} : vector<1x128xf32> to vector<1x32xf32>
    %82 = vector.extract_strided_slice %77 {offsets = [0, 96], sizes = [1, 32], strides = [1, 1]} : vector<1x128xf32> to vector<1x32xf32>
    %83 = arith.mulf %80, %65 : vector<1x32xf32>
    %84 = arith.mulf %79, %81 : vector<1x32xf32>
    %85 = arith.addf %83, %84 : vector<1x32xf32>
    %86 = math.tanh %85 : vector<1x32xf32>
    %87 = arith.mulf %82, %86 : vector<1x32xf32>
    %c3 = arith.constant 3 : index
    %c0_21 = arith.constant 0 : index
    %88 = vector.load %arg8[%c3, %c0_21] : memref<16x32xf32, #tpu.memory_space<vmem>>, vector<1x32xf32>
    tpu.vector_store %arg8[%c3, %c0_21], %87 {strides = array<i32>} : memref<16x32xf32, #tpu.memory_space<vmem>>, vector<1x32xf32>,
    %89 = arith.truncf %87 : vector<1x32xf32> to vector<1x32xbf16>
    %cst_22 = arith.constant dense<0.000000e+00> : vector<1x128xf32>
    %90 = tpu.matmul %89, %6, %cst_22 {dimension_numbers = #tpu.dot_dimension_numbers<[1], [0], [0], [1], [0, 0, 1, 1], [], []>} : vector<1x32xbf16>, vector<32x128xbf16>, vector<1x128xf32> -> vector<1x128xf32>
    %91 = vector.extract_strided_slice %5 {offsets = [4, 0], sizes = [1, 128], strides = [1, 1]} : vector<16x128xf32> to vector<1x128xf32>
    %92 = arith.addf %91, %90 : vector<1x128xf32>
    %93 = arith.negf %92 : vector<1x128xf32>
    %94 = math.exp %93 : vector<1x128xf32>
    %cst_23 = arith.constant 1.000000e+00 : f32
    %95 = vector.broadcast %cst_23 : f32 to vector<1x128xf32>
    %96 = arith.addf %95, %94 : vector<1x128xf32>
    %97 = arith.divf %95, %96 : vector<1x128xf32>
    %98 = math.tanh %92 : vector<1x128xf32>
    %99 = vector.extract_strided_slice %97 {offsets = [0, 0], sizes = [1, 32], strides = [1, 1]} : vector<1x128xf32> to vector<1x32xf32>
    %100 = vector.extract_strided_slice %97 {offsets = [0, 32], sizes = [1, 32], strides = [1, 1]} : vector<1x128xf32> to vector<1x32xf32>
    %101 = vector.extract_strided_slice %98 {offsets = [0, 64], sizes = [1, 32], strides = [1, 1]} : vector<1x128xf32> to vector<1x32xf32>
    %102 = vector.extract_strided_slice %97 {offsets = [0, 96], sizes = [1, 32], strides = [1, 1]} : vector<1x128xf32> to vector<1x32xf32>
    %103 = arith.mulf %100, %85 : vector<1x32xf32>
    %104 = arith.mulf %99, %101 : vector<1x32xf32>
    %105 = arith.addf %103, %104 : vector<1x32xf32>
    %106 = math.tanh %105 : vector<1x32xf32>
    %107 = arith.mulf %102, %106 : vector<1x32xf32>
    %c4 = arith.constant 4 : index
    %c0_24 = arith.constant 0 : index
    %108 = vector.load %arg8[%c4, %c0_24] : memref<16x32xf32, #tpu.memory_space<vmem>>, vector<1x32xf32>
    tpu.vector_store %arg8[%c4, %c0_24], %107 {strides = array<i32>} : memref<16x32xf32, #tpu.memory_space<vmem>>, vector<1x32xf32>,
    %109 = arith.truncf %107 : vector<1x32xf32> to vector<1x32xbf16>
    %cst_25 = arith.constant dense<0.000000e+00> : vector<1x128xf32>
    %110 = tpu.matmul %109, %6, %cst_25 {dimension_numbers = #tpu.dot_dimension_numbers<[1], [0], [0], [1], [0, 0, 1, 1], [], []>} : vector<1x32xbf16>, vector<32x128xbf16>, vector<1x128xf32> -> vector<1x128xf32>
    %111 = vector.extract_strided_slice %5 {offsets = [5, 0], sizes = [1, 128], strides = [1, 1]} : vector<16x128xf32> to vector<1x128xf32>
    %112 = arith.addf %111, %110 : vector<1x128xf32>
    %113 = arith.negf %112 : vector<1x128xf32>
    %114 = math.exp %113 : vector<1x128xf32>
    %cst_26 = arith.constant 1.000000e+00 : f32
    %115 = vector.broadcast %cst_26 : f32 to vector<1x128xf32>
    %116 = arith.addf %115, %114 : vector<1x128xf32>
    %117 = arith.divf %115, %116 : vector<1x128xf32>
    %118 = math.tanh %112 : vector<1x128xf32>
    %119 = vector.extract_strided_slice %117 {offsets = [0, 0], sizes = [1, 32], strides = [1, 1]} : vector<1x128xf32> to vector<1x32xf32>
    %120 = vector.extract_strided_slice %117 {offsets = [0, 32], sizes = [1, 32], strides = [1, 1]} : vector<1x128xf32> to vector<1x32xf32>
    %121 = vector.extract_strided_slice %118 {offsets = [0, 64], sizes = [1, 32], strides = [1, 1]} : vector<1x128xf32> to vector<1x32xf32>
    %122 = vector.extract_strided_slice %117 {offsets = [0, 96], sizes = [1, 32], strides = [1, 1]} : vector<1x128xf32> to vector<1x32xf32>
    %123 = arith.mulf %120, %105 : vector<1x32xf32>
    %124 = arith.mulf %119, %121 : vector<1x32xf32>
    %125 = arith.addf %123, %124 : vector<1x32xf32>
    %126 = math.tanh %125 : vector<1x32xf32>
    %127 = arith.mulf %122, %126 : vector<1x32xf32>
    %c5 = arith.constant 5 : index
    %c0_27 = arith.constant 0 : index
    %128 = vector.load %arg8[%c5, %c0_27] : memref<16x32xf32, #tpu.memory_space<vmem>>, vector<1x32xf32>
    tpu.vector_store %arg8[%c5, %c0_27], %127 {strides = array<i32>} : memref<16x32xf32, #tpu.memory_space<vmem>>, vector<1x32xf32>,
    %129 = arith.truncf %127 : vector<1x32xf32> to vector<1x32xbf16>
    %cst_28 = arith.constant dense<0.000000e+00> : vector<1x128xf32>
    %130 = tpu.matmul %129, %6, %cst_28 {dimension_numbers = #tpu.dot_dimension_numbers<[1], [0], [0], [1], [0, 0, 1, 1], [], []>} : vector<1x32xbf16>, vector<32x128xbf16>, vector<1x128xf32> -> vector<1x128xf32>
    %131 = vector.extract_strided_slice %5 {offsets = [6, 0], sizes = [1, 128], strides = [1, 1]} : vector<16x128xf32> to vector<1x128xf32>
    %132 = arith.addf %131, %130 : vector<1x128xf32>
    %133 = arith.negf %132 : vector<1x128xf32>
    %134 = math.exp %133 : vector<1x128xf32>
    %cst_29 = arith.constant 1.000000e+00 : f32
    %135 = vector.broadcast %cst_29 : f32 to vector<1x128xf32>
    %136 = arith.addf %135, %134 : vector<1x128xf32>
    %137 = arith.divf %135, %136 : vector<1x128xf32>
    %138 = math.tanh %132 : vector<1x128xf32>
    %139 = vector.extract_strided_slice %137 {offsets = [0, 0], sizes = [1, 32], strides = [1, 1]} : vector<1x128xf32> to vector<1x32xf32>
    %140 = vector.extract_strided_slice %137 {offsets = [0, 32], sizes = [1, 32], strides = [1, 1]} : vector<1x128xf32> to vector<1x32xf32>
    %141 = vector.extract_strided_slice %138 {offsets = [0, 64], sizes = [1, 32], strides = [1, 1]} : vector<1x128xf32> to vector<1x32xf32>
    %142 = vector.extract_strided_slice %137 {offsets = [0, 96], sizes = [1, 32], strides = [1, 1]} : vector<1x128xf32> to vector<1x32xf32>
    %143 = arith.mulf %140, %125 : vector<1x32xf32>
    %144 = arith.mulf %139, %141 : vector<1x32xf32>
    %145 = arith.addf %143, %144 : vector<1x32xf32>
    %146 = math.tanh %145 : vector<1x32xf32>
    %147 = arith.mulf %142, %146 : vector<1x32xf32>
    %c6 = arith.constant 6 : index
    %c0_30 = arith.constant 0 : index
    %148 = vector.load %arg8[%c6, %c0_30] : memref<16x32xf32, #tpu.memory_space<vmem>>, vector<1x32xf32>
    tpu.vector_store %arg8[%c6, %c0_30], %147 {strides = array<i32>} : memref<16x32xf32, #tpu.memory_space<vmem>>, vector<1x32xf32>,
    %149 = arith.truncf %147 : vector<1x32xf32> to vector<1x32xbf16>
    %cst_31 = arith.constant dense<0.000000e+00> : vector<1x128xf32>
    %150 = tpu.matmul %149, %6, %cst_31 {dimension_numbers = #tpu.dot_dimension_numbers<[1], [0], [0], [1], [0, 0, 1, 1], [], []>} : vector<1x32xbf16>, vector<32x128xbf16>, vector<1x128xf32> -> vector<1x128xf32>
    %151 = vector.extract_strided_slice %5 {offsets = [7, 0], sizes = [1, 128], strides = [1, 1]} : vector<16x128xf32> to vector<1x128xf32>
    %152 = arith.addf %151, %150 : vector<1x128xf32>
    %153 = arith.negf %152 : vector<1x128xf32>
    %154 = math.exp %153 : vector<1x128xf32>
    %cst_32 = arith.constant 1.000000e+00 : f32
    %155 = vector.broadcast %cst_32 : f32 to vector<1x128xf32>
    %156 = arith.addf %155, %154 : vector<1x128xf32>
    %157 = arith.divf %155, %156 : vector<1x128xf32>
    %158 = math.tanh %152 : vector<1x128xf32>
    %159 = vector.extract_strided_slice %157 {offsets = [0, 0], sizes = [1, 32], strides = [1, 1]} : vector<1x128xf32> to vector<1x32xf32>
    %160 = vector.extract_strided_slice %157 {offsets = [0, 32], sizes = [1, 32], strides = [1, 1]} : vector<1x128xf32> to vector<1x32xf32>
    %161 = vector.extract_strided_slice %158 {offsets = [0, 64], sizes = [1, 32], strides = [1, 1]} : vector<1x128xf32> to vector<1x32xf32>
    %162 = vector.extract_strided_slice %157 {offsets = [0, 96], sizes = [1, 32], strides = [1, 1]} : vector<1x128xf32> to vector<1x32xf32>
    %163 = arith.mulf %160, %145 : vector<1x32xf32>
    %164 = arith.mulf %159, %161 : vector<1x32xf32>
    %165 = arith.addf %163, %164 : vector<1x32xf32>
    %166 = math.tanh %165 : vector<1x32xf32>
    %167 = arith.mulf %162, %166 : vector<1x32xf32>
    %c7 = arith.constant 7 : index
    %c0_33 = arith.constant 0 : index
    %168 = vector.load %arg8[%c7, %c0_33] : memref<16x32xf32, #tpu.memory_space<vmem>>, vector<1x32xf32>
    tpu.vector_store %arg8[%c7, %c0_33], %167 {strides = array<i32>} : memref<16x32xf32, #tpu.memory_space<vmem>>, vector<1x32xf32>,
    %169 = arith.truncf %167 : vector<1x32xf32> to vector<1x32xbf16>
    %cst_34 = arith.constant dense<0.000000e+00> : vector<1x128xf32>
    %170 = tpu.matmul %169, %6, %cst_34 {dimension_numbers = #tpu.dot_dimension_numbers<[1], [0], [0], [1], [0, 0, 1, 1], [], []>} : vector<1x32xbf16>, vector<32x128xbf16>, vector<1x128xf32> -> vector<1x128xf32>
    %171 = vector.extract_strided_slice %5 {offsets = [8, 0], sizes = [1, 128], strides = [1, 1]} : vector<16x128xf32> to vector<1x128xf32>
    %172 = arith.addf %171, %170 : vector<1x128xf32>
    %173 = arith.negf %172 : vector<1x128xf32>
    %174 = math.exp %173 : vector<1x128xf32>
    %cst_35 = arith.constant 1.000000e+00 : f32
    %175 = vector.broadcast %cst_35 : f32 to vector<1x128xf32>
    %176 = arith.addf %175, %174 : vector<1x128xf32>
    %177 = arith.divf %175, %176 : vector<1x128xf32>
    %178 = math.tanh %172 : vector<1x128xf32>
    %179 = vector.extract_strided_slice %177 {offsets = [0, 0], sizes = [1, 32], strides = [1, 1]} : vector<1x128xf32> to vector<1x32xf32>
    %180 = vector.extract_strided_slice %177 {offsets = [0, 32], sizes = [1, 32], strides = [1, 1]} : vector<1x128xf32> to vector<1x32xf32>
    %181 = vector.extract_strided_slice %178 {offsets = [0, 64], sizes = [1, 32], strides = [1, 1]} : vector<1x128xf32> to vector<1x32xf32>
    %182 = vector.extract_strided_slice %177 {offsets = [0, 96], sizes = [1, 32], strides = [1, 1]} : vector<1x128xf32> to vector<1x32xf32>
    %183 = arith.mulf %180, %165 : vector<1x32xf32>
    %184 = arith.mulf %179, %181 : vector<1x32xf32>
    %185 = arith.addf %183, %184 : vector<1x32xf32>
    %186 = math.tanh %185 : vector<1x32xf32>
    %187 = arith.mulf %182, %186 : vector<1x32xf32>
    %c8 = arith.constant 8 : index
    %c0_36 = arith.constant 0 : index
    %188 = vector.load %arg8[%c8, %c0_36] : memref<16x32xf32, #tpu.memory_space<vmem>>, vector<1x32xf32>
    tpu.vector_store %arg8[%c8, %c0_36], %187 {strides = array<i32>} : memref<16x32xf32, #tpu.memory_space<vmem>>, vector<1x32xf32>,
    %189 = arith.truncf %187 : vector<1x32xf32> to vector<1x32xbf16>
    %cst_37 = arith.constant dense<0.000000e+00> : vector<1x128xf32>
    %190 = tpu.matmul %189, %6, %cst_37 {dimension_numbers = #tpu.dot_dimension_numbers<[1], [0], [0], [1], [0, 0, 1, 1], [], []>} : vector<1x32xbf16>, vector<32x128xbf16>, vector<1x128xf32> -> vector<1x128xf32>
    %191 = vector.extract_strided_slice %5 {offsets = [9, 0], sizes = [1, 128], strides = [1, 1]} : vector<16x128xf32> to vector<1x128xf32>
    %192 = arith.addf %191, %190 : vector<1x128xf32>
    %193 = arith.negf %192 : vector<1x128xf32>
    %194 = math.exp %193 : vector<1x128xf32>
    %cst_38 = arith.constant 1.000000e+00 : f32
    %195 = vector.broadcast %cst_38 : f32 to vector<1x128xf32>
    %196 = arith.addf %195, %194 : vector<1x128xf32>
    %197 = arith.divf %195, %196 : vector<1x128xf32>
    %198 = math.tanh %192 : vector<1x128xf32>
    %199 = vector.extract_strided_slice %197 {offsets = [0, 0], sizes = [1, 32], strides = [1, 1]} : vector<1x128xf32> to vector<1x32xf32>
    %200 = vector.extract_strided_slice %197 {offsets = [0, 32], sizes = [1, 32], strides = [1, 1]} : vector<1x128xf32> to vector<1x32xf32>
    %201 = vector.extract_strided_slice %198 {offsets = [0, 64], sizes = [1, 32], strides = [1, 1]} : vector<1x128xf32> to vector<1x32xf32>
    %202 = vector.extract_strided_slice %197 {offsets = [0, 96], sizes = [1, 32], strides = [1, 1]} : vector<1x128xf32> to vector<1x32xf32>
    %203 = arith.mulf %200, %185 : vector<1x32xf32>
    %204 = arith.mulf %199, %201 : vector<1x32xf32>
    %205 = arith.addf %203, %204 : vector<1x32xf32>
    %206 = math.tanh %205 : vector<1x32xf32>
    %207 = arith.mulf %202, %206 : vector<1x32xf32>
    %c9 = arith.constant 9 : index
    %c0_39 = arith.constant 0 : index
    %208 = vector.load %arg8[%c9, %c0_39] : memref<16x32xf32, #tpu.memory_space<vmem>>, vector<1x32xf32>
    tpu.vector_store %arg8[%c9, %c0_39], %207 {strides = array<i32>} : memref<16x32xf32, #tpu.memory_space<vmem>>, vector<1x32xf32>,
    %209 = arith.truncf %207 : vector<1x32xf32> to vector<1x32xbf16>
    %cst_40 = arith.constant dense<0.000000e+00> : vector<1x128xf32>
    %210 = tpu.matmul %209, %6, %cst_40 {dimension_numbers = #tpu.dot_dimension_numbers<[1], [0], [0], [1], [0, 0, 1, 1], [], []>} : vector<1x32xbf16>, vector<32x128xbf16>, vector<1x128xf32> -> vector<1x128xf32>
    %211 = vector.extract_strided_slice %5 {offsets = [10, 0], sizes = [1, 128], strides = [1, 1]} : vector<16x128xf32> to vector<1x128xf32>
    %212 = arith.addf %211, %210 : vector<1x128xf32>
    %213 = arith.negf %212 : vector<1x128xf32>
    %214 = math.exp %213 : vector<1x128xf32>
    %cst_41 = arith.constant 1.000000e+00 : f32
    %215 = vector.broadcast %cst_41 : f32 to vector<1x128xf32>
    %216 = arith.addf %215, %214 : vector<1x128xf32>
    %217 = arith.divf %215, %216 : vector<1x128xf32>
    %218 = math.tanh %212 : vector<1x128xf32>
    %219 = vector.extract_strided_slice %217 {offsets = [0, 0], sizes = [1, 32], strides = [1, 1]} : vector<1x128xf32> to vector<1x32xf32>
    %220 = vector.extract_strided_slice %217 {offsets = [0, 32], sizes = [1, 32], strides = [1, 1]} : vector<1x128xf32> to vector<1x32xf32>
    %221 = vector.extract_strided_slice %218 {offsets = [0, 64], sizes = [1, 32], strides = [1, 1]} : vector<1x128xf32> to vector<1x32xf32>
    %222 = vector.extract_strided_slice %217 {offsets = [0, 96], sizes = [1, 32], strides = [1, 1]} : vector<1x128xf32> to vector<1x32xf32>
    %223 = arith.mulf %220, %205 : vector<1x32xf32>
    %224 = arith.mulf %219, %221 : vector<1x32xf32>
    %225 = arith.addf %223, %224 : vector<1x32xf32>
    %226 = math.tanh %225 : vector<1x32xf32>
    %227 = arith.mulf %222, %226 : vector<1x32xf32>
    %c10 = arith.constant 10 : index
    %c0_42 = arith.constant 0 : index
    %228 = vector.load %arg8[%c10, %c0_42] : memref<16x32xf32, #tpu.memory_space<vmem>>, vector<1x32xf32>
    tpu.vector_store %arg8[%c10, %c0_42], %227 {strides = array<i32>} : memref<16x32xf32, #tpu.memory_space<vmem>>, vector<1x32xf32>,
    %229 = arith.truncf %227 : vector<1x32xf32> to vector<1x32xbf16>
    %cst_43 = arith.constant dense<0.000000e+00> : vector<1x128xf32>
    %230 = tpu.matmul %229, %6, %cst_43 {dimension_numbers = #tpu.dot_dimension_numbers<[1], [0], [0], [1], [0, 0, 1, 1], [], []>} : vector<1x32xbf16>, vector<32x128xbf16>, vector<1x128xf32> -> vector<1x128xf32>
    %231 = vector.extract_strided_slice %5 {offsets = [11, 0], sizes = [1, 128], strides = [1, 1]} : vector<16x128xf32> to vector<1x128xf32>
    %232 = arith.addf %231, %230 : vector<1x128xf32>
    %233 = arith.negf %232 : vector<1x128xf32>
    %234 = math.exp %233 : vector<1x128xf32>
    %cst_44 = arith.constant 1.000000e+00 : f32
    %235 = vector.broadcast %cst_44 : f32 to vector<1x128xf32>
    %236 = arith.addf %235, %234 : vector<1x128xf32>
    %237 = arith.divf %235, %236 : vector<1x128xf32>
    %238 = math.tanh %232 : vector<1x128xf32>
    %239 = vector.extract_strided_slice %237 {offsets = [0, 0], sizes = [1, 32], strides = [1, 1]} : vector<1x128xf32> to vector<1x32xf32>
    %240 = vector.extract_strided_slice %237 {offsets = [0, 32], sizes = [1, 32], strides = [1, 1]} : vector<1x128xf32> to vector<1x32xf32>
    %241 = vector.extract_strided_slice %238 {offsets = [0, 64], sizes = [1, 32], strides = [1, 1]} : vector<1x128xf32> to vector<1x32xf32>
    %242 = vector.extract_strided_slice %237 {offsets = [0, 96], sizes = [1, 32], strides = [1, 1]} : vector<1x128xf32> to vector<1x32xf32>
    %243 = arith.mulf %240, %225 : vector<1x32xf32>
    %244 = arith.mulf %239, %241 : vector<1x32xf32>
    %245 = arith.addf %243, %244 : vector<1x32xf32>
    %246 = math.tanh %245 : vector<1x32xf32>
    %247 = arith.mulf %242, %246 : vector<1x32xf32>
    %c11 = arith.constant 11 : index
    %c0_45 = arith.constant 0 : index
    %248 = vector.load %arg8[%c11, %c0_45] : memref<16x32xf32, #tpu.memory_space<vmem>>, vector<1x32xf32>
    tpu.vector_store %arg8[%c11, %c0_45], %247 {strides = array<i32>} : memref<16x32xf32, #tpu.memory_space<vmem>>, vector<1x32xf32>,
    %249 = arith.truncf %247 : vector<1x32xf32> to vector<1x32xbf16>
    %cst_46 = arith.constant dense<0.000000e+00> : vector<1x128xf32>
    %250 = tpu.matmul %249, %6, %cst_46 {dimension_numbers = #tpu.dot_dimension_numbers<[1], [0], [0], [1], [0, 0, 1, 1], [], []>} : vector<1x32xbf16>, vector<32x128xbf16>, vector<1x128xf32> -> vector<1x128xf32>
    %251 = vector.extract_strided_slice %5 {offsets = [12, 0], sizes = [1, 128], strides = [1, 1]} : vector<16x128xf32> to vector<1x128xf32>
    %252 = arith.addf %251, %250 : vector<1x128xf32>
    %253 = arith.negf %252 : vector<1x128xf32>
    %254 = math.exp %253 : vector<1x128xf32>
    %cst_47 = arith.constant 1.000000e+00 : f32
    %255 = vector.broadcast %cst_47 : f32 to vector<1x128xf32>
    %256 = arith.addf %255, %254 : vector<1x128xf32>
    %257 = arith.divf %255, %256 : vector<1x128xf32>
    %258 = math.tanh %252 : vector<1x128xf32>
    %259 = vector.extract_strided_slice %257 {offsets = [0, 0], sizes = [1, 32], strides = [1, 1]} : vector<1x128xf32> to vector<1x32xf32>
    %260 = vector.extract_strided_slice %257 {offsets = [0, 32], sizes = [1, 32], strides = [1, 1]} : vector<1x128xf32> to vector<1x32xf32>
    %261 = vector.extract_strided_slice %258 {offsets = [0, 64], sizes = [1, 32], strides = [1, 1]} : vector<1x128xf32> to vector<1x32xf32>
    %262 = vector.extract_strided_slice %257 {offsets = [0, 96], sizes = [1, 32], strides = [1, 1]} : vector<1x128xf32> to vector<1x32xf32>
    %263 = arith.mulf %260, %245 : vector<1x32xf32>
    %264 = arith.mulf %259, %261 : vector<1x32xf32>
    %265 = arith.addf %263, %264 : vector<1x32xf32>
    %266 = math.tanh %265 : vector<1x32xf32>
    %267 = arith.mulf %262, %266 : vector<1x32xf32>
    %c12 = arith.constant 12 : index
    %c0_48 = arith.constant 0 : index
    %268 = vector.load %arg8[%c12, %c0_48] : memref<16x32xf32, #tpu.memory_space<vmem>>, vector<1x32xf32>
    tpu.vector_store %arg8[%c12, %c0_48], %267 {strides = array<i32>} : memref<16x32xf32, #tpu.memory_space<vmem>>, vector<1x32xf32>,
    %269 = arith.truncf %267 : vector<1x32xf32> to vector<1x32xbf16>
    %cst_49 = arith.constant dense<0.000000e+00> : vector<1x128xf32>
    %270 = tpu.matmul %269, %6, %cst_49 {dimension_numbers = #tpu.dot_dimension_numbers<[1], [0], [0], [1], [0, 0, 1, 1], [], []>} : vector<1x32xbf16>, vector<32x128xbf16>, vector<1x128xf32> -> vector<1x128xf32>
    %271 = vector.extract_strided_slice %5 {offsets = [13, 0], sizes = [1, 128], strides = [1, 1]} : vector<16x128xf32> to vector<1x128xf32>
    %272 = arith.addf %271, %270 : vector<1x128xf32>
    %273 = arith.negf %272 : vector<1x128xf32>
    %274 = math.exp %273 : vector<1x128xf32>
    %cst_50 = arith.constant 1.000000e+00 : f32
    %275 = vector.broadcast %cst_50 : f32 to vector<1x128xf32>
    %276 = arith.addf %275, %274 : vector<1x128xf32>
    %277 = arith.divf %275, %276 : vector<1x128xf32>
    %278 = math.tanh %272 : vector<1x128xf32>
    %279 = vector.extract_strided_slice %277 {offsets = [0, 0], sizes = [1, 32], strides = [1, 1]} : vector<1x128xf32> to vector<1x32xf32>
    %280 = vector.extract_strided_slice %277 {offsets = [0, 32], sizes = [1, 32], strides = [1, 1]} : vector<1x128xf32> to vector<1x32xf32>
    %281 = vector.extract_strided_slice %278 {offsets = [0, 64], sizes = [1, 32], strides = [1, 1]} : vector<1x128xf32> to vector<1x32xf32>
    %282 = vector.extract_strided_slice %277 {offsets = [0, 96], sizes = [1, 32], strides = [1, 1]} : vector<1x128xf32> to vector<1x32xf32>
    %283 = arith.mulf %280, %265 : vector<1x32xf32>
    %284 = arith.mulf %279, %281 : vector<1x32xf32>
    %285 = arith.addf %283, %284 : vector<1x32xf32>
    %286 = math.tanh %285 : vector<1x32xf32>
    %287 = arith.mulf %282, %286 : vector<1x32xf32>
    %c13 = arith.constant 13 : index
    %c0_51 = arith.constant 0 : index
    %288 = vector.load %arg8[%c13, %c0_51] : memref<16x32xf32, #tpu.memory_space<vmem>>, vector<1x32xf32>
    tpu.vector_store %arg8[%c13, %c0_51], %287 {strides = array<i32>} : memref<16x32xf32, #tpu.memory_space<vmem>>, vector<1x32xf32>,
    %289 = arith.truncf %287 : vector<1x32xf32> to vector<1x32xbf16>
    %cst_52 = arith.constant dense<0.000000e+00> : vector<1x128xf32>
    %290 = tpu.matmul %289, %6, %cst_52 {dimension_numbers = #tpu.dot_dimension_numbers<[1], [0], [0], [1], [0, 0, 1, 1], [], []>} : vector<1x32xbf16>, vector<32x128xbf16>, vector<1x128xf32> -> vector<1x128xf32>
    %291 = vector.extract_strided_slice %5 {offsets = [14, 0], sizes = [1, 128], strides = [1, 1]} : vector<16x128xf32> to vector<1x128xf32>
    %292 = arith.addf %291, %290 : vector<1x128xf32>
    %293 = arith.negf %292 : vector<1x128xf32>
    %294 = math.exp %293 : vector<1x128xf32>
    %cst_53 = arith.constant 1.000000e+00 : f32
    %295 = vector.broadcast %cst_53 : f32 to vector<1x128xf32>
    %296 = arith.addf %295, %294 : vector<1x128xf32>
    %297 = arith.divf %295, %296 : vector<1x128xf32>
    %298 = math.tanh %292 : vector<1x128xf32>
    %299 = vector.extract_strided_slice %297 {offsets = [0, 0], sizes = [1, 32], strides = [1, 1]} : vector<1x128xf32> to vector<1x32xf32>
    %300 = vector.extract_strided_slice %297 {offsets = [0, 32], sizes = [1, 32], strides = [1, 1]} : vector<1x128xf32> to vector<1x32xf32>
    %301 = vector.extract_strided_slice %298 {offsets = [0, 64], sizes = [1, 32], strides = [1, 1]} : vector<1x128xf32> to vector<1x32xf32>
    %302 = vector.extract_strided_slice %297 {offsets = [0, 96], sizes = [1, 32], strides = [1, 1]} : vector<1x128xf32> to vector<1x32xf32>
    %303 = arith.mulf %300, %285 : vector<1x32xf32>
    %304 = arith.mulf %299, %301 : vector<1x32xf32>
    %305 = arith.addf %303, %304 : vector<1x32xf32>
    %306 = math.tanh %305 : vector<1x32xf32>
    %307 = arith.mulf %302, %306 : vector<1x32xf32>
    %c14 = arith.constant 14 : index
    %c0_54 = arith.constant 0 : index
    %308 = vector.load %arg8[%c14, %c0_54] : memref<16x32xf32, #tpu.memory_space<vmem>>, vector<1x32xf32>
    tpu.vector_store %arg8[%c14, %c0_54], %307 {strides = array<i32>} : memref<16x32xf32, #tpu.memory_space<vmem>>, vector<1x32xf32>,
    %309 = arith.truncf %307 : vector<1x32xf32> to vector<1x32xbf16>
    %cst_55 = arith.constant dense<0.000000e+00> : vector<1x128xf32>
    %310 = tpu.matmul %309, %6, %cst_55 {dimension_numbers = #tpu.dot_dimension_numbers<[1], [0], [0], [1], [0, 0, 1, 1], [], []>} : vector<1x32xbf16>, vector<32x128xbf16>, vector<1x128xf32> -> vector<1x128xf32>
    %311 = vector.extract_strided_slice %5 {offsets = [15, 0], sizes = [1, 128], strides = [1, 1]} : vector<16x128xf32> to vector<1x128xf32>
    %312 = arith.addf %311, %310 : vector<1x128xf32>
    %313 = arith.negf %312 : vector<1x128xf32>
    %314 = math.exp %313 : vector<1x128xf32>
    %cst_56 = arith.constant 1.000000e+00 : f32
    %315 = vector.broadcast %cst_56 : f32 to vector<1x128xf32>
    %316 = arith.addf %315, %314 : vector<1x128xf32>
    %317 = arith.divf %315, %316 : vector<1x128xf32>
    %318 = math.tanh %312 : vector<1x128xf32>
    %319 = vector.extract_strided_slice %317 {offsets = [0, 0], sizes = [1, 32], strides = [1, 1]} : vector<1x128xf32> to vector<1x32xf32>
    %320 = vector.extract_strided_slice %317 {offsets = [0, 32], sizes = [1, 32], strides = [1, 1]} : vector<1x128xf32> to vector<1x32xf32>
    %321 = vector.extract_strided_slice %318 {offsets = [0, 64], sizes = [1, 32], strides = [1, 1]} : vector<1x128xf32> to vector<1x32xf32>
    %322 = vector.extract_strided_slice %317 {offsets = [0, 96], sizes = [1, 32], strides = [1, 1]} : vector<1x128xf32> to vector<1x32xf32>
    %323 = arith.mulf %320, %305 : vector<1x32xf32>
    %324 = arith.mulf %319, %321 : vector<1x32xf32>
    %325 = arith.addf %323, %324 : vector<1x32xf32>
    %326 = math.tanh %325 : vector<1x32xf32>
    %327 = arith.mulf %322, %326 : vector<1x32xf32>
    %c15 = arith.constant 15 : index
    %c0_57 = arith.constant 0 : index
    %328 = vector.load %arg8[%c15, %c0_57] : memref<16x32xf32, #tpu.memory_space<vmem>>, vector<1x32xf32>
    tpu.vector_store %arg8[%c15, %c0_57], %327 {strides = array<i32>} : memref<16x32xf32, #tpu.memory_space<vmem>>, vector<1x32xf32>,
    %c0_58 = arith.constant 0 : index
    %c0_59 = arith.constant 0 : index
    %329 = vector.load %arg8[%c0_58, %c0_59] : memref<16x32xf32, #tpu.memory_space<vmem>>, vector<16x32xf32>
    %330 = tpu.transpose %329, [1, 0] : vector<16x32xf32> -> vector<32x16xf32>
    %cst_60 = arith.constant dense<0.000000e+00> : vector<16x16xf32>
    %331 = tpu.matmul %329, %330, %cst_60 {dimension_numbers = #tpu.dot_dimension_numbers<[1], [0], [0], [1], [0, 0, 1, 1], [], []>} : vector<16x32xf32>, vector<32x16xf32>, vector<16x16xf32> -> vector<16x16xf32>
    %332 = arith.mulf %331, %331 : vector<16x16xf32>
    %cst_61 = arith.constant dense<0.000000e+00> : vector<16xf32>
    %333 = vector.multi_reduction <add>, %332, %cst_61 [1] : vector<16x16xf32> to vector<16xf32>
    %334 = vector.shape_cast %333 : vector<16xf32> to vector<16x1xf32>
    %335 = math.sqrt %334 : vector<16x1xf32>
    %cst_62 = arith.constant 9.99999996E-13 : f32
    %336 = vector.broadcast %cst_62 : f32 to vector<16x1xf32>
    %337 = arith.maximumf %335, %336 : vector<16x1xf32>
    %338 = vector.broadcast %337 : vector<16x1xf32> to vector<16x16xf32>
    %339 = arith.divf %331, %338 : vector<16x16xf32>
    %c0_63 = arith.constant 0 : index
    %c0_64 = arith.constant 0 : index
    %340 = vector.load %arg4[%c0_63, %c0_64] : memref<32x1xf32, #tpu.memory_space<vmem>>, vector<32x1xf32>
    %cst_65 = arith.constant dense<0.000000e+00> : vector<16x1xf32>
    %341 = tpu.matmul %329, %340, %cst_65 {dimension_numbers = #tpu.dot_dimension_numbers<[1], [0], [0], [1], [0, 0, 1, 1], [], []>} : vector<16x32xf32>, vector<32x1xf32>, vector<16x1xf32> -> vector<16x1xf32>
    %c0_66 = arith.constant 0 : index
    %c0_67 = arith.constant 0 : index
    %342 = vector.load %arg5[%c0_66, %c0_67] : memref<16x1xf32, #tpu.memory_space<vmem>>, vector<16x1xf32>
    %cst_68 = arith.constant dense<0.000000e+00> : vector<16x1xf32>
    %343 = tpu.matmul %339, %342, %cst_68 {dimension_numbers = #tpu.dot_dimension_numbers<[1], [0], [0], [1], [0, 0, 1, 1], [], []>} : vector<16x16xf32>, vector<16x1xf32>, vector<16x1xf32> -> vector<16x1xf32>
    %344 = arith.addf %341, %343 : vector<16x1xf32>
    %c0_69 = arith.constant 0 : index
    %c0_70 = arith.constant 0 : index
    %345 = memref.load %arg6[%c0_69, %c0_70] : memref<1x1xf32, #tpu.memory_space<smem>>
    %346 = vector.broadcast %345 : f32 to vector<16x1xf32>
    %347 = arith.addf %344, %346 : vector<16x1xf32>
    %c0_71 = arith.constant 0 : index
    %c0_72 = arith.constant 0 : index
    %348 = vector.load %arg7[%c0_71, %c0_72] : memref<16x1xf32, #tpu.memory_space<vmem>>, vector<16x1xf32>
    tpu.vector_store %arg7[%c0_71, %c0_72], %347 {strides = array<i32>} : memref<16x1xf32, #tpu.memory_space<vmem>>, vector<16x1xf32>,
    return
  }
}

</mosaic_0001>

<llo_original>
// kernel: tpu_custom_call.1
$region0: #{tpu_custom_call.1}
  #allocation0 [shape = 'u32[]', space=smem, size = 0x4, offset = 0x4, fixed_abs, tag = 'smem constant byte address 0x4 - core index']
  #allocation1 [shape = 'u32[144,128]{1,0:T(1,128)}', space=vmem, size = 0x12000, scoped, tag = 'internal scratch']
  #allocation2 [shape = 'f32[16,32]{1,0:T(8,128)}', space=vmem, size = 0x2000, scoped, tag = 'scratch operand']
  #allocation3 [shape = 'f32[1,1]{1,0:T(1,128)S(6)}', space=smem, size = 0x200, scoped, tag = 'scoped memory for tpu_custom_call.1']
  %s0 = inlined_call_operand.vmem [shape: bf16[16,32], index: 0, kind: input, shape index: {}]
  %s1 = inlined_call_operand.vmem [shape: bf16[32,128], index: 1, kind: input, shape index: {}]
  %s2 = inlined_call_operand.vmem [shape: bf16[32,128], index: 2, kind: input, shape index: {}]
  %s3 = inlined_call_operand.vmem [shape: f32[1,128], index: 3, kind: input, shape index: {}]
  %s4 = inlined_call_operand.vmem [shape: f32[32,1], index: 4, kind: input, shape index: {}]
  %s5 = inlined_call_operand.vmem [shape: f32[16,1], index: 5, kind: input, shape index: {}]
  %s6 = inlined_call_operand.<no memory space> [shape: f32[1,1], index: 6, kind: input, shape index: {}]
  %s7 = inlined_call_operand.vmem [shape: f32[16,1], index: 7, kind: output, shape index: {}]
  %s8 = sld [smem:[#allocation0]]
  $region38: #{tpu_custom_call.1} parent=0
    _
  %s10 = ssub.s32 1, %s8
  %s11 = scalar_select 0, %s10, %s8
  %12 = sst [smem:[#allocation3]] %s6
  // Predicated region
  $region2: #{tpu_custom_call.1} parent=0 // pred_check
    _
  $region3: #{tpu_custom_call.1} parent=0 // pred_check_branch
    %14 = sbr.rel (0) target = $region5
  $region4: #{tpu_custom_call.1} parent=0 // pred_region
    _
  $region5: #{tpu_custom_call.1} parent=0 // pred_fallthru
    _
  // Predicated region
  $region6: #{tpu_custom_call.1} parent=0 // pred_check
    _
  $region7: #{tpu_custom_call.1} parent=0 // pred_check_branch
    %16 = sbr.rel (0) target = $region9
  $region8: #{tpu_custom_call.1} parent=0 // pred_region
    _
  $region9: #{tpu_custom_call.1} parent=0 // pred_fallthru
    _
  // Predicated region
  $region10: #{tpu_custom_call.1} parent=0 // pred_check
    _
  $region11: #{tpu_custom_call.1} parent=0 // pred_check_branch
    %18 = sbr.rel (0) target = $region13
  $region12: #{tpu_custom_call.1} parent=0 // pred_region
    _
  $region13: #{tpu_custom_call.1} parent=0 // pred_fallthru
    _
  // Predicated region
  $region14: #{tpu_custom_call.1} parent=0 // pred_check
    _
  $region15: #{tpu_custom_call.1} parent=0 // pred_check_branch
    %20 = sbr.rel (0) target = $region17
  $region16: #{tpu_custom_call.1} parent=0 // pred_region
    _
  $region17: #{tpu_custom_call.1} parent=0 // pred_fallthru
    _
  // Predicated region
  $region18: #{tpu_custom_call.1} parent=0 // pred_check
    _
  $region19: #{tpu_custom_call.1} parent=0 // pred_check_branch
    %22 = sbr.rel (0) target = $region21
  $region20: #{tpu_custom_call.1} parent=0 // pred_region
    _
  $region21: #{tpu_custom_call.1} parent=0 // pred_fallthru
    _
  // Predicated region
  $region22: #{tpu_custom_call.1} parent=0 // pred_check
    _
  $region23: #{tpu_custom_call.1} parent=0 // pred_check_branch
    %24 = sbr.rel (0) target = $region25
  $region24: #{tpu_custom_call.1} parent=0 // pred_region
    _
  $region25: #{tpu_custom_call.1} parent=0 // pred_fallthru
    _
  // Predicated region
  $region26: #{tpu_custom_call.1} parent=0 // pred_check
    _
  $region27: #{tpu_custom_call.1} parent=0 // pred_check_branch
    %26 = sbr.rel (0) target = $region29
  $region28: #{tpu_custom_call.1} parent=0 // pred_region
    _
  $region29: #{tpu_custom_call.1} parent=0 // pred_fallthru
    _
  %v28 = vld [vmem:[%s0] sm:$0xf]
  %v29 = vld [vmem:[%s0 + $0x4] sm:$0xf]
  %v30 = vld [vmem:[%s1] sm:$0xf]
  %v31 = vld [vmem:[%s1 + $0x4] sm:$0xf]
  %v32 = vld [vmem:[%s1 + $0x8] sm:$0xf]
  %v33 = vld [vmem:[%s1 + $0xc] sm:$0xf]
  %v34 = vld [vmem:[%s3] sm:$0x1]
  %v36 = vlaneseq
  %v37 = vshrl.u32 %v36, 7
  %v38 = vsub.s32 0, %v37
  %v39 = vrot.slane %v34, %v38
  %v43 = vunpack.c.l.b16 %v28
  %v44 = vunpack.c.l.b16 %v29
  %v45 = vpack.c.b16 %v44, %v43
  %v50 = vunpack.c.l.b16 %v30
  %v51 = vunpack.c.l.b16 %v31
  %v52 = vunpack.c.l.b16 %v32
  %v53 = vunpack.c.l.b16 %v33
  %v54 = vpack.c.b16 %v51, %v50
  %v55 = vpack.c.b16 %v53, %v52
  %vm58 = vcmask 261120
  %v60 = vsel %vm58, %v45, 0
  %62 = vmatprep.subr.bf16.mxu0 0
  %63 = vmatpush1.bf16.msra.mxu0 %v54
  %64 = vmatprep.subr.bf16.mxu0 0
  %65 = vmatpush1.bf16.msra.mxu0 %v55
  %66 = vmatprep.subr.bf16.mxu0 0
  %67 = vmatpush1.bf16.msra.mxu0 0
  %68 = vmatprep.subr.bf16.mxu0 0
  %69 = vmatpush1.bf16.msra.mxu0 0
  %70 = vmatprep.subr.bf16.mxu0 0
  %71 = vmatpush1.bf16.msra.mxu0 0
  %72 = vmatprep.subr.bf16.mxu0 0
  %73 = vmatpush1.bf16.msra.mxu0 0
  %74 = vmatprep.subr.bf16.mxu0 0
  %75 = vmatpush1.bf16.msra.mxu0 0
  %76 = vmatprep.subr.bf16.mxu0 0
  %77 = vmatpush1.bf16.msra.mxu0 0
  %78 = vmatprep.subr.bf16.mxu0 0
  %79 = vmatpush1.bf16.msra.mxu0 0
  %80 = vmatprep.subr.bf16.mxu0 0
  %81 = vmatpush1.bf16.msra.mxu0 0
  %82 = vmatprep.subr.bf16.mxu0 0
  %83 = vmatpush1.bf16.msra.mxu0 0
  %84 = vmatprep.subr.bf16.mxu0 0
  %85 = vmatpush1.bf16.msra.mxu0 0
  %86 = vmatprep.subr.bf16.mxu0 0
  %87 = vmatpush1.bf16.msra.mxu0 0
  %88 = vmatprep.subr.bf16.mxu0 0
  %89 = vmatpush1.bf16.msra.mxu0 0
  %90 = vmatprep.subr.bf16.mxu0 0
  %91 = vmatpush1.bf16.msra.mxu0 0
  %92 = vmatprep.subr.bf16.mxu0 0
  %93 = vmatpush1.bf16.msra.mxu0 0
  %94 = vmatprep.mubr.bf16.mxu0 0
  %95 = vmatmul.mubr.bf16.gmra.mrb[0].mxu0 %v60
  %v96 = vpop.f32.mrb[0].mxu0
  %v97 = vadd.f32 %v39, %v96
  %v98 = vpop.f32.mrb[0].mxu0
  %v99 = vpop.f32.mrb[0].mxu0
  %v100 = vadd.f32 %v39, %v99
  %v101 = vpop.f32.mrb[0].mxu0
  %102 = vdwg.mxu0
  %v103 = vld [vmem:[%s2] sm:$0xf]
  %v104 = vld [vmem:[%s2 + $0x4] sm:$0xf]
  %v105 = vld [vmem:[%s2 + $0x8] sm:$0xf]
  %v106 = vld [vmem:[%s2 + $0xc] sm:$0xf]
  %v111 = vunpack.c.l.b16 %v103
  %v112 = vunpack.c.l.b16 %v104
  %v113 = vunpack.c.l.b16 %v105
  %v114 = vunpack.c.l.b16 %v106
  %v115 = vpack.c.b16 %v112, %v111
  %v116 = vpack.c.b16 %v114, %v113
  %v120 = vsel %vm58, 0, 0
  %122 = vmatprep.subr.bf16.mxu0 0
  %123 = vmatpush1.bf16.msra.mxu0 %v115
  %124 = vmatprep.subr.bf16.mxu0 0
  %125 = vmatpush1.bf16.msra.mxu0 %v116
  %126 = vmatprep.subr.bf16.mxu0 0
  %127 = vmatpush1.bf16.msra.mxu0 0
  %128 = vmatprep.subr.bf16.mxu0 0
  %129 = vmatpush1.bf16.msra.mxu0 0
  %130 = vmatprep.subr.bf16.mxu0 0
  %131 = vmatpush1.bf16.msra.mxu0 0
  %132 = vmatprep.subr.bf16.mxu0 0
  %133 = vmatpush1.bf16.msra.mxu0 0
  %134 = vmatprep.subr.bf16.mxu0 0
  %135 = vmatpush1.bf16.msra.mxu0 0
  %136 = vmatprep.subr.bf16.mxu0 0
  %137 = vmatpush1.bf16.msra.mxu0 0
  %138 = vmatprep.subr.bf16.mxu0 0
  %139 = vmatpush1.bf16.msra.mxu0 0
  %140 = vmatprep.subr.bf16.mxu0 0
  %141 = vmatpush1.bf16.msra.mxu0 0
  %142 = vmatprep.subr.bf16.mxu0 0
  %143 = vmatpush1.bf16.msra.mxu0 0
  %144 = vmatprep.subr.bf16.mxu0 0
  %145 = vmatpush1.bf16.msra.mxu0 0
  %146 = vmatprep.subr.bf16.mxu0 0
  %147 = vmatpush1.bf16.msra.mxu0 0
  %148 = vmatprep.subr.bf16.mxu0 0
  %149 = vmatpush1.bf16.msra.mxu0 0
  %150 = vmatprep.subr.bf16.mxu0 0
  %151 = vmatpush1.bf16.msra.mxu0 0
  %152 = vmatprep.subr.bf16.mxu0 0
  %153 = vmatpush1.bf16.msra.mxu0 0
  %154 = vmatprep.mubr.bf16.mxu0 0
  %155 = vmatmul.mubr.bf16.gmra.mrb[0].mxu0 %v120
  %v156 = vpop.f32.mrb[0].mxu0
  %v157 = vadd.f32 0.0, %v156
  %v158 = vpop.f32.mrb[0].mxu0
  %v159 = vpop.f32.mrb[0].mxu0
  %v160 = vpop.f32.mrb[0].mxu0
  %161 = vdwg.mxu0
  %v162 = vadd.f32 %v97, %v157
  %v163 = vxor.u32 %v162, 2147483648
  %v164 = vmul.f32 %v163, 1.442695
  %v165 = vpow.pop %v164
  %v166 = vadd.f32 %v165, 1.0
  %v167 = vrcp.pop %v166
  %v168 = vmul.f32 1.0, %v167
  %v169 = vtanh.pop %v162
  %v170 = vmul.f32 %v168, 0.0
  %172 = vrot.lane.b32.xlu0 %v169, 64
  %v173 = vpop.permute.xlu0 %172
  %v175 = vmul.f32 %v168, %v173
  %177 = vrot.lane.b32.xlu0 %v175, 32
  %v178 = vpop.permute.xlu0 %177
  %v180 = vadd.f32 %v170, %v178
  %v181 = vtanh.pop %v180
  %183 = vrot.lane.b32.xlu0 %v181, 64
  %v184 = vpop.permute.xlu0 %183
  %v186 = vmul.f32 %v168, %v184
  %188 = vrot.lane.b32.xlu0 %v186, 32
  %v189 = vpop.permute.xlu0 %188
  %vm191 = vcmask 253952
  %192 = vst.msk [vmem:[#allocation2] sm:$0x1] %vm191, %v189
  %v193 = vpack.c.bf16 %v186, %v186
  %195 = vrot.lane.b32.xlu0 %v193, 32
  %v196 = vpop.permute.xlu0 %195
  %v198 = vsel %vm58, %v196, 0
  %200 = vmatprep.subr.bf16.mxu0 0
  %201 = vmatpush1.bf16.msra.mxu0 %v115
  %202 = vmatprep.subr.bf16.mxu0 0
  %203 = vmatpush1.bf16.msra.mxu0 %v116
  %204 = vmatprep.subr.bf16.mxu0 0
  %205 = vmatpush1.bf16.msra.mxu0 0
  %206 = vmatprep.subr.bf16.mxu0 0
  %207 = vmatpush1.bf16.msra.mxu0 0
  %208 = vmatprep.subr.bf16.mxu0 0
  %209 = vmatpush1.bf16.msra.mxu0 0
  %210 = vmatprep.subr.bf16.mxu0 0
  %211 = vmatpush1.bf16.msra.mxu0 0
  %212 = vmatprep.subr.bf16.mxu0 0
  %213 = vmatpush1.bf16.msra.mxu0 0
  %214 = vmatprep.subr.bf16.mxu0 0
  %215 = vmatpush1.bf16.msra.mxu0 0
  %216 = vmatprep.subr.bf16.mxu0 0
  %217 = vmatpush1.bf16.msra.mxu0 0
  %218 = vmatprep.subr.bf16.mxu0 0
  %219 = vmatpush1.bf16.msra.mxu0 0
  %220 = vmatprep.subr.bf16.mxu0 0
  %221 = vmatpush1.bf16.msra.mxu0 0
  %222 = vmatprep.subr.bf16.mxu0 0
  %223 = vmatpush1.bf16.msra.mxu0 0
  %224 = vmatprep.subr.bf16.mxu0 0
  %225 = vmatpush1.bf16.msra.mxu0 0
  %226 = vmatprep.subr.bf16.mxu0 0
  %227 = vmatpush1.bf16.msra.mxu0 0
  %228 = vmatprep.subr.bf16.mxu0 0
  %229 = vmatpush1.bf16.msra.mxu0 0
  %230 = vmatprep.subr.bf16.mxu0 0
  %231 = vmatpush1.bf16.msra.mxu0 0
  %232 = vmatprep.mubr.bf16.mxu0 0
  %233 = vmatmul.mubr.bf16.gmra.mrb[0].mxu0 %v198
  %v234 = vpop.f32.mrb[0].mxu0
  %v235 = vadd.f32 0.0, %v234
  %v236 = vpop.f32.mrb[0].mxu0
  %v237 = vpop.f32.mrb[0].mxu0
  %v238 = vpop.f32.mrb[0].mxu0
  %239 = vdwg.mxu0
  %v241 = vrot.slane %v235, 7
  %v243 = vadd.f32 %v97, %v241
  %v244 = vxor.u32 %v243, 2147483648
  %v245 = vmul.f32 %v244, 1.442695
  %v246 = vpow.pop %v245
  %v247 = vadd.f32 %v246, 1.0
  %v248 = vrcp.pop %v247
  %v249 = vmul.f32 1.0, %v248
  %v250 = vtanh.pop %v243
  %v252 = vrot.slane %v180, 7
  %v254 = vmul.f32 %v249, %v252
  %256 = vrot.lane.b32.xlu0 %v250, 64
  %v257 = vpop.permute.xlu0 %256
  %v259 = vmul.f32 %v249, %v257
  %261 = vrot.lane.b32.xlu0 %v259, 32
  %v262 = vpop.permute.xlu0 %261
  %v264 = vadd.f32 %v254, %v262
  %v265 = vtanh.pop %v264
  %267 = vrot.lane.b32.xlu0 %v265, 64
  %v268 = vpop.permute.xlu0 %267
  %v270 = vmul.f32 %v249, %v268
  %272 = vrot.lane.b32.xlu0 %v270, 32
  %v273 = vpop.permute.xlu0 %272
  %vm275 = vcmask 254977
  %276 = vst.msk [vmem:[#allocation2] sm:$0x2] %vm275, %v273
  %v277 = vpack.c.bf16 %v270, %v270
  %v279 = vshrl.u32 %v277, 16
  %281 = vrot.lane.b32.xlu0 %v279, 32
  %v282 = vpop.permute.xlu0 %281
  %v284 = vsel %vm58, %v282, 0
  %286 = vmatprep.subr.bf16.mxu0 0
  %287 = vmatpush1.bf16.msra.mxu0 %v115
  %288 = vmatprep.subr.bf16.mxu0 0
  %289 = vmatpush1.bf16.msra.mxu0 %v116
  %290 = vmatprep.subr.bf16.mxu0 0
  %291 = vmatpush1.bf16.msra.mxu0 0
  %292 = vmatprep.subr.bf16.mxu0 0
  %293 = vmatpush1.bf16.msra.mxu0 0
  %294 = vmatprep.subr.bf16.mxu0 0
  %295 = vmatpush1.bf16.msra.mxu0 0
  %296 = vmatprep.subr.bf16.mxu0 0
  %297 = vmatpush1.bf16.msra.mxu0 0
  %298 = vmatprep.subr.bf16.mxu0 0
  %299 = vmatpush1.bf16.msra.mxu0 0
  %300 = vmatprep.subr.bf16.mxu0 0
  %301 = vmatpush1.bf16.msra.mxu0 0
  %302 = vmatprep.subr.bf16.mxu0 0
  %303 = vmatpush1.bf16.msra.mxu0 0
  %304 = vmatprep.subr.bf16.mxu0 0
  %305 = vmatpush1.bf16.msra.mxu0 0
  %306 = vmatprep.subr.bf16.mxu0 0
  %307 = vmatpush1.bf16.msra.mxu0 0
  %308 = vmatprep.subr.bf16.mxu0 0
  %309 = vmatpush1.bf16.msra.mxu0 0
  %310 = vmatprep.subr.bf16.mxu0 0
  %311 = vmatpush1.bf16.msra.mxu0 0
  %312 = vmatprep.subr.bf16.mxu0 0
  %313 = vmatpush1.bf16.msra.mxu0 0
  %314 = vmatprep.subr.bf16.mxu0 0
  %315 = vmatpush1.bf16.msra.mxu0 0
  %316 = vmatprep.subr.bf16.mxu0 0
  %317 = vmatpush1.bf16.msra.mxu0 0
  %318 = vmatprep.mubr.bf16.mxu0 0
  %319 = vmatmul.mubr.bf16.gmra.mrb[0].mxu0 %v284
  %v320 = vpop.f32.mrb[0].mxu0
  %v321 = vadd.f32 0.0, %v320
  %v322 = vpop.f32.mrb[0].mxu0
  %v323 = vpop.f32.mrb[0].mxu0
  %v324 = vpop.f32.mrb[0].mxu0
  %325 = vdwg.mxu0
  %v327 = vrot.slane %v321, 6
  %v329 = vadd.f32 %v97, %v327
  %v330 = vxor.u32 %v329, 2147483648
  %v331 = vmul.f32 %v330, 1.442695
  %v332 = vpow.pop %v331
  %v333 = vadd.f32 %v332, 1.0
  %v334 = vrcp.pop %v333
  %v335 = vmul.f32 1.0, %v334
  %v336 = vtanh.pop %v329
  %v338 = vrot.slane %v264, 7
  %v340 = vmul.f32 %v335, %v338
  %342 = vrot.lane.b32.xlu0 %v336, 64
  %v343 = vpop.permute.xlu0 %342
  %v345 = vmul.f32 %v335, %v343
  %347 = vrot.lane.b32.xlu0 %v345, 32
  %v348 = vpop.permute.xlu0 %347
  %v350 = vadd.f32 %v340, %v348
  %v351 = vtanh.pop %v350
  %353 = vrot.lane.b32.xlu0 %v351, 64
  %v354 = vpop.permute.xlu0 %353
  %v356 = vmul.f32 %v335, %v354
  %358 = vrot.lane.b32.xlu0 %v356, 32
  %v359 = vpop.permute.xlu0 %358
  %vm361 = vcmask 256002
  %362 = vst.msk [vmem:[#allocation2] sm:$0x4] %vm361, %v359
  %v363 = vpack.c.bf16 %v356, %v356
  %v365 = vrot.slane %v363, 1
  %366 = vrot.lane.b32.xlu0 %v365, 32
  %v367 = vpop.permute.xlu0 %366
  %v369 = vsel %vm58, %v367, 0
  %371 = vmatprep.subr.bf16.mxu0 0
  %372 = vmatpush1.bf16.msra.mxu0 %v115
  %373 = vmatprep.subr.bf16.mxu0 0
  %374 = vmatpush1.bf16.msra.mxu0 %v116
  %375 = vmatprep.subr.bf16.mxu0 0
  %376 = vmatpush1.bf16.msra.mxu0 0
  %377 = vmatprep.subr.bf16.mxu0 0
  %378 = vmatpush1.bf16.msra.mxu0 0
  %379 = vmatprep.subr.bf16.mxu0 0
  %380 = vmatpush1.bf16.msra.mxu0 0
  %381 = vmatprep.subr.bf16.mxu0 0
  %382 = vmatpush1.bf16.msra.mxu0 0
  %383 = vmatprep.subr.bf16.mxu0 0
  %384 = vmatpush1.bf16.msra.mxu0 0
  %385 = vmatprep.subr.bf16.mxu0 0
  %386 = vmatpush1.bf16.msra.mxu0 0
  %387 = vmatprep.subr.bf16.mxu0 0
  %388 = vmatpush1.bf16.msra.mxu0 0
  %389 = vmatprep.subr.bf16.mxu0 0
  %390 = vmatpush1.bf16.msra.mxu0 0
  %391 = vmatprep.subr.bf16.mxu0 0
  %392 = vmatpush1.bf16.msra.mxu0 0
  %393 = vmatprep.subr.bf16.mxu0 0
  %394 = vmatpush1.bf16.msra.mxu0 0
  %395 = vmatprep.subr.bf16.mxu0 0
  %396 = vmatpush1.bf16.msra.mxu0 0
  %397 = vmatprep.subr.bf16.mxu0 0
  %398 = vmatpush1.bf16.msra.mxu0 0
  %399 = vmatprep.subr.bf16.mxu0 0
  %400 = vmatpush1.bf16.msra.mxu0 0
  %401 = vmatprep.subr.bf16.mxu0 0
  %402 = vmatpush1.bf16.msra.mxu0 0
  %403 = vmatprep.mubr.bf16.mxu0 0
  %404 = vmatmul.mubr.bf16.gmra.mrb[0].mxu0 %v369
  %v405 = vpop.f32.mrb[0].mxu0
  %v406 = vadd.f32 0.0, %v405
  %v407 = vpop.f32.mrb[0].mxu0
  %v408 = vpop.f32.mrb[0].mxu0
  %v409 = vpop.f32.mrb[0].mxu0
  %410 = vdwg.mxu0
  %v412 = vrot.slane %v406, 5
  %v414 = vadd.f32 %v97, %v412
  %v415 = vxor.u32 %v414, 2147483648
  %v416 = vmul.f32 %v415, 1.442695
  %v417 = vpow.pop %v416
  %v418 = vadd.f32 %v417, 1.0
  %v419 = vrcp.pop %v418
  %v420 = vmul.f32 1.0, %v419
  %v421 = vtanh.pop %v414
  %v423 = vrot.slane %v350, 7
  %v425 = vmul.f32 %v420, %v423
  %427 = vrot.lane.b32.xlu0 %v421, 64
  %v428 = vpop.permute.xlu0 %427
  %v430 = vmul.f32 %v420, %v428
  %432 = vrot.lane.b32.xlu0 %v430, 32
  %v433 = vpop.permute.xlu0 %432
  %v435 = vadd.f32 %v425, %v433
  %v436 = vtanh.pop %v435
  %438 = vrot.lane.b32.xlu0 %v436, 64
  %v439 = vpop.permute.xlu0 %438
  %v441 = vmul.f32 %v420, %v439
  %443 = vrot.lane.b32.xlu0 %v441, 32
  %v444 = vpop.permute.xlu0 %443
  %vm446 = vcmask 257027
  %447 = vst.msk [vmem:[#allocation2] sm:$0x8] %vm446, %v444
  %v448 = vpack.c.bf16 %v441, %v441
  %v450 = vshrl.u32 %v448, 16
  %v452 = vrot.slane %v450, 1
  %453 = vrot.lane.b32.xlu0 %v452, 32
  %v454 = vpop.permute.xlu0 %453
  %v456 = vsel %vm58, %v454, 0
  %458 = vmatprep.subr.bf16.mxu0 0
  %459 = vmatpush1.bf16.msra.mxu0 %v115
  %460 = vmatprep.subr.bf16.mxu0 0
  %461 = vmatpush1.bf16.msra.mxu0 %v116
  %462 = vmatprep.subr.bf16.mxu0 0
  %463 = vmatpush1.bf16.msra.mxu0 0
  %464 = vmatprep.subr.bf16.mxu0 0
  %465 = vmatpush1.bf16.msra.mxu0 0
  %466 = vmatprep.subr.bf16.mxu0 0
  %467 = vmatpush1.bf16.msra.mxu0 0
  %468 = vmatprep.subr.bf16.mxu0 0
  %469 = vmatpush1.bf16.msra.mxu0 0
  %470 = vmatprep.subr.bf16.mxu0 0
  %471 = vmatpush1.bf16.msra.mxu0 0
  %472 = vmatprep.subr.bf16.mxu0 0
  %473 = vmatpush1.bf16.msra.mxu0 0
  %474 = vmatprep.subr.bf16.mxu0 0
  %475 = vmatpush1.bf16.msra.mxu0 0
  %476 = vmatprep.subr.bf16.mxu0 0
  %477 = vmatpush1.bf16.msra.mxu0 0
  %478 = vmatprep.subr.bf16.mxu0 0
  %479 = vmatpush1.bf16.msra.mxu0 0
  %480 = vmatprep.subr.bf16.mxu0 0
  %481 = vmatpush1.bf16.msra.mxu0 0
  %482 = vmatprep.subr.bf16.mxu0 0
  %483 = vmatpush1.bf16.msra.mxu0 0
  %484 = vmatprep.subr.bf16.mxu0 0
  %485 = vmatpush1.bf16.msra.mxu0 0
  %486 = vmatprep.subr.bf16.mxu0 0
  %487 = vmatpush1.bf16.msra.mxu0 0
  %488 = vmatprep.subr.bf16.mxu0 0
  %489 = vmatpush1.bf16.msra.mxu0 0
  %490 = vmatprep.mubr.bf16.mxu0 0
  %491 = vmatmul.mubr.bf16.gmra.mrb[0].mxu0 %v456
  %v492 = vpop.f32.mrb[0].mxu0
  %v493 = vadd.f32 0.0, %v492
  %v494 = vpop.f32.mrb[0].mxu0
  %v495 = vpop.f32.mrb[0].mxu0
  %v496 = vpop.f32.mrb[0].mxu0
  %497 = vdwg.mxu0
  %v499 = vrot.slane %v493, 4
  %v501 = vadd.f32 %v97, %v499
  %v502 = vxor.u32 %v501, 2147483648
  %v503 = vmul.f32 %v502, 1.442695
  %v504 = vpow.pop %v503
  %v505 = vadd.f32 %v504, 1.0
  %v506 = vrcp.pop %v505
  %v507 = vmul.f32 1.0, %v506
  %v508 = vtanh.pop %v501
  %v510 = vrot.slane %v435, 7
  %v512 = vmul.f32 %v507, %v510
  %514 = vrot.lane.b32.xlu0 %v508, 64
  %v515 = vpop.permute.xlu0 %514
  %v517 = vmul.f32 %v507, %v515
  %519 = vrot.lane.b32.xlu0 %v517, 32
  %v520 = vpop.permute.xlu0 %519
  %v522 = vadd.f32 %v512, %v520
  %v523 = vtanh.pop %v522
  %525 = vrot.lane.b32.xlu0 %v523, 64
  %v526 = vpop.permute.xlu0 %525
  %v528 = vmul.f32 %v507, %v526
  %530 = vrot.lane.b32.xlu0 %v528, 32
  %v531 = vpop.permute.xlu0 %530
  %vm533 = vcmask 258052
  %534 = vst.msk [vmem:[#allocation2] sm:$0x10] %vm533, %v531
  %v535 = vpack.c.bf16 %v528, %v528
  %v537 = vrot.slane %v535, 2
  %538 = vrot.lane.b32.xlu0 %v537, 32
  %v539 = vpop.permute.xlu0 %538
  %v541 = vsel %vm58, %v539, 0
  %543 = vmatprep.subr.bf16.mxu0 0
  %544 = vmatpush1.bf16.msra.mxu0 %v115
  %545 = vmatprep.subr.bf16.mxu0 0
  %546 = vmatpush1.bf16.msra.mxu0 %v116
  %547 = vmatprep.subr.bf16.mxu0 0
  %548 = vmatpush1.bf16.msra.mxu0 0
  %549 = vmatprep.subr.bf16.mxu0 0
  %550 = vmatpush1.bf16.msra.mxu0 0
  %551 = vmatprep.subr.bf16.mxu0 0
  %552 = vmatpush1.bf16.msra.mxu0 0
  %553 = vmatprep.subr.bf16.mxu0 0
  %554 = vmatpush1.bf16.msra.mxu0 0
  %555 = vmatprep.subr.bf16.mxu0 0
  %556 = vmatpush1.bf16.msra.mxu0 0
  %557 = vmatprep.subr.bf16.mxu0 0
  %558 = vmatpush1.bf16.msra.mxu0 0
  %559 = vmatprep.subr.bf16.mxu0 0
  %560 = vmatpush1.bf16.msra.mxu0 0
  %561 = vmatprep.subr.bf16.mxu0 0
  %562 = vmatpush1.bf16.msra.mxu0 0
  %563 = vmatprep.subr.bf16.mxu0 0
  %564 = vmatpush1.bf16.msra.mxu0 0
  %565 = vmatprep.subr.bf16.mxu0 0
  %566 = vmatpush1.bf16.msra.mxu0 0
  %567 = vmatprep.subr.bf16.mxu0 0
  %568 = vmatpush1.bf16.msra.mxu0 0
  %569 = vmatprep.subr.bf16.mxu0 0
  %570 = vmatpush1.bf16.msra.mxu0 0
  %571 = vmatprep.subr.bf16.mxu0 0
  %572 = vmatpush1.bf16.msra.mxu0 0
  %573 = vmatprep.subr.bf16.mxu0 0
  %574 = vmatpush1.bf16.msra.mxu0 0
  %575 = vmatprep.mubr.bf16.mxu0 0
  %576 = vmatmul.mubr.bf16.gmra.mrb[0].mxu0 %v541
  %v577 = vpop.f32.mrb[0].mxu0
  %v578 = vadd.f32 0.0, %v577
  %v579 = vpop.f32.mrb[0].mxu0
  %v580 = vpop.f32.mrb[0].mxu0
  %v581 = vpop.f32.mrb[0].mxu0
  %582 = vdwg.mxu0
  %v584 = vrot.slane %v578, 3
  %v586 = vadd.f32 %v97, %v584
  %v587 = vxor.u32 %v586, 2147483648
  %v588 = vmul.f32 %v587, 1.442695
  %v589 = vpow.pop %v588
  %v590 = vadd.f32 %v589, 1.0
  %v591 = vrcp.pop %v590
  %v592 = vmul.f32 1.0, %v591
  %v593 = vtanh.pop %v586
  %v595 = vrot.slane %v522, 7
  %v597 = vmul.f32 %v592, %v595
  %599 = vrot.lane.b32.xlu0 %v593, 64
  %v600 = vpop.permute.xlu0 %599
  %v602 = vmul.f32 %v592, %v600
  %604 = vrot.lane.b32.xlu0 %v602, 32
  %v605 = vpop.permute.xlu0 %604
  %v607 = vadd.f32 %v597, %v605
  %v608 = vtanh.pop %v607
  %610 = vrot.lane.b32.xlu0 %v608, 64
  %v611 = vpop.permute.xlu0 %610
  %v613 = vmul.f32 %v592, %v611
  %615 = vrot.lane.b32.xlu0 %v613, 32
  %v616 = vpop.permute.xlu0 %615
  %vm618 = vcmask 259077
  %619 = vst.msk [vmem:[#allocation2] sm:$0x20] %vm618, %v616
  %v620 = vpack.c.bf16 %v613, %v613
  %v622 = vshrl.u32 %v620, 16
  %v624 = vrot.slane %v622, 2
  %625 = vrot.lane.b32.xlu0 %v624, 32
  %v626 = vpop.permute.xlu0 %625
  %v628 = vsel %vm58, %v626, 0
  %630 = vmatprep.subr.bf16.mxu0 0
  %631 = vmatpush1.bf16.msra.mxu0 %v115
  %632 = vmatprep.subr.bf16.mxu0 0
  %633 = vmatpush1.bf16.msra.mxu0 %v116
  %634 = vmatprep.subr.bf16.mxu0 0
  %635 = vmatpush1.bf16.msra.mxu0 0
  %636 = vmatprep.subr.bf16.mxu0 0
  %637 = vmatpush1.bf16.msra.mxu0 0
  %638 = vmatprep.subr.bf16.mxu0 0
  %639 = vmatpush1.bf16.msra.mxu0 0
  %640 = vmatprep.subr.bf16.mxu0 0
  %641 = vmatpush1.bf16.msra.mxu0 0
  %642 = vmatprep.subr.bf16.mxu0 0
  %643 = vmatpush1.bf16.msra.mxu0 0
  %644 = vmatprep.subr.bf16.mxu0 0
  %645 = vmatpush1.bf16.msra.mxu0 0
  %646 = vmatprep.subr.bf16.mxu0 0
  %647 = vmatpush1.bf16.msra.mxu0 0
  %648 = vmatprep.subr.bf16.mxu0 0
  %649 = vmatpush1.bf16.msra.mxu0 0
  %650 = vmatprep.subr.bf16.mxu0 0
  %651 = vmatpush1.bf16.msra.mxu0 0
  %652 = vmatprep.subr.bf16.mxu0 0
  %653 = vmatpush1.bf16.msra.mxu0 0
  %654 = vmatprep.subr.bf16.mxu0 0
  %655 = vmatpush1.bf16.msra.mxu0 0
  %656 = vmatprep.subr.bf16.mxu0 0
  %657 = vmatpush1.bf16.msra.mxu0 0
  %658 = vmatprep.subr.bf16.mxu0 0
  %659 = vmatpush1.bf16.msra.mxu0 0
  %660 = vmatprep.subr.bf16.mxu0 0
  %661 = vmatpush1.bf16.msra.mxu0 0
  %662 = vmatprep.mubr.bf16.mxu0 0
  %663 = vmatmul.mubr.bf16.gmra.mrb[0].mxu0 %v628
  %v664 = vpop.f32.mrb[0].mxu0
  %v665 = vadd.f32 0.0, %v664
  %v666 = vpop.f32.mrb[0].mxu0
  %v667 = vpop.f32.mrb[0].mxu0
  %v668 = vpop.f32.mrb[0].mxu0
  %669 = vdwg.mxu0
  %v671 = vrot.slane %v665, 2
  %v673 = vadd.f32 %v97, %v671
  %v674 = vxor.u32 %v673, 2147483648
  %v675 = vmul.f32 %v674, 1.442695
  %v676 = vpow.pop %v675
  %v677 = vadd.f32 %v676, 1.0
  %v678 = vrcp.pop %v677
  %v679 = vmul.f32 1.0, %v678
  %v680 = vtanh.pop %v673
  %v682 = vrot.slane %v607, 7
  %v684 = vmul.f32 %v679, %v682
  %686 = vrot.lane.b32.xlu0 %v680, 64
  %v687 = vpop.permute.xlu0 %686
  %v689 = vmul.f32 %v679, %v687
  %691 = vrot.lane.b32.xlu0 %v689, 32
  %v692 = vpop.permute.xlu0 %691
  %v694 = vadd.f32 %v684, %v692
  %v695 = vtanh.pop %v694
  %697 = vrot.lane.b32.xlu0 %v695, 64
  %v698 = vpop.permute.xlu0 %697
  %v700 = vmul.f32 %v679, %v698
  %702 = vrot.lane.b32.xlu0 %v700, 32
  %v703 = vpop.permute.xlu0 %702
  %vm705 = vcmask 260102
  %706 = vst.msk [vmem:[#allocation2] sm:$0x40] %vm705, %v703
  %v707 = vpack.c.bf16 %v700, %v700
  %v709 = vrot.slane %v707, 3
  %710 = vrot.lane.b32.xlu0 %v709, 32
  %v711 = vpop.permute.xlu0 %710
  %v713 = vsel %vm58, %v711, 0
  %715 = vmatprep.subr.bf16.mxu0 0
  %716 = vmatpush1.bf16.msra.mxu0 %v115
  %717 = vmatprep.subr.bf16.mxu0 0
  %718 = vmatpush1.bf16.msra.mxu0 %v116
  %719 = vmatprep.subr.bf16.mxu0 0
  %720 = vmatpush1.bf16.msra.mxu0 0
  %721 = vmatprep.subr.bf16.mxu0 0
  %722 = vmatpush1.bf16.msra.mxu0 0
  %723 = vmatprep.subr.bf16.mxu0 0
  %724 = vmatpush1.bf16.msra.mxu0 0
  %725 = vmatprep.subr.bf16.mxu0 0
  %726 = vmatpush1.bf16.msra.mxu0 0
  %727 = vmatprep.subr.bf16.mxu0 0
  %728 = vmatpush1.bf16.msra.mxu0 0
  %729 = vmatprep.subr.bf16.mxu0 0
  %730 = vmatpush1.bf16.msra.mxu0 0
  %731 = vmatprep.subr.bf16.mxu0 0
  %732 = vmatpush1.bf16.msra.mxu0 0
  %733 = vmatprep.subr.bf16.mxu0 0
  %734 = vmatpush1.bf16.msra.mxu0 0
  %735 = vmatprep.subr.bf16.mxu0 0
  %736 = vmatpush1.bf16.msra.mxu0 0
  %737 = vmatprep.subr.bf16.mxu0 0
  %738 = vmatpush1.bf16.msra.mxu0 0
  %739 = vmatprep.subr.bf16.mxu0 0
  %740 = vmatpush1.bf16.msra.mxu0 0
  %741 = vmatprep.subr.bf16.mxu0 0
  %742 = vmatpush1.bf16.msra.mxu0 0
  %743 = vmatprep.subr.bf16.mxu0 0
  %744 = vmatpush1.bf16.msra.mxu0 0
  %745 = vmatprep.subr.bf16.mxu0 0
  %746 = vmatpush1.bf16.msra.mxu0 0
  %747 = vmatprep.mubr.bf16.mxu0 0
  %748 = vmatmul.mubr.bf16.gmra.mrb[0].mxu0 %v713
  %v749 = vpop.f32.mrb[0].mxu0
  %v750 = vadd.f32 0.0, %v749
  %v751 = vpop.f32.mrb[0].mxu0
  %v752 = vpop.f32.mrb[0].mxu0
  %v753 = vpop.f32.mrb[0].mxu0
  %754 = vdwg.mxu0
  %v756 = vrot.slane %v750, 1
  %v758 = vadd.f32 %v97, %v756
  %v759 = vxor.u32 %v758, 2147483648
  %v760 = vmul.f32 %v759, 1.442695
  %v761 = vpow.pop %v760
  %v762 = vadd.f32 %v761, 1.0
  %v763 = vrcp.pop %v762
  %v764 = vmul.f32 1.0, %v763
  %v765 = vtanh.pop %v758
  %v767 = vrot.slane %v694, 7
  %v769 = vmul.f32 %v764, %v767
  %771 = vrot.lane.b32.xlu0 %v765, 64
  %v772 = vpop.permute.xlu0 %771
  %v774 = vmul.f32 %v764, %v772
  %776 = vrot.lane.b32.xlu0 %v774, 32
  %v777 = vpop.permute.xlu0 %776
  %v779 = vadd.f32 %v769, %v777
  %v780 = vtanh.pop %v779
  %782 = vrot.lane.b32.xlu0 %v780, 64
  %v783 = vpop.permute.xlu0 %782
  %v785 = vmul.f32 %v764, %v783
  %787 = vrot.lane.b32.xlu0 %v785, 32
  %v788 = vpop.permute.xlu0 %787
  %vm790 = vcmask 261127
  %791 = vst.msk [vmem:[#allocation2] sm:$0x80] %vm790, %v788
  %v792 = vpack.c.bf16 %v785, %v785
  %v794 = vshrl.u32 %v792, 16
  %v796 = vrot.slane %v794, 3
  %797 = vrot.lane.b32.xlu0 %v796, 32
  %v798 = vpop.permute.xlu0 %797
  %v800 = vsel %vm58, %v798, 0
  %802 = vmatprep.subr.bf16.mxu0 0
  %803 = vmatpush1.bf16.msra.mxu0 %v115
  %804 = vmatprep.subr.bf16.mxu0 0
  %805 = vmatpush1.bf16.msra.mxu0 %v116
  %806 = vmatprep.subr.bf16.mxu0 0
  %807 = vmatpush1.bf16.msra.mxu0 0
  %808 = vmatprep.subr.bf16.mxu0 0
  %809 = vmatpush1.bf16.msra.mxu0 0
  %810 = vmatprep.subr.bf16.mxu0 0
  %811 = vmatpush1.bf16.msra.mxu0 0
  %812 = vmatprep.subr.bf16.mxu0 0
  %813 = vmatpush1.bf16.msra.mxu0 0
  %814 = vmatprep.subr.bf16.mxu0 0
  %815 = vmatpush1.bf16.msra.mxu0 0
  %816 = vmatprep.subr.bf16.mxu0 0
  %817 = vmatpush1.bf16.msra.mxu0 0
  %818 = vmatprep.subr.bf16.mxu0 0
  %819 = vmatpush1.bf16.msra.mxu0 0
  %820 = vmatprep.subr.bf16.mxu0 0
  %821 = vmatpush1.bf16.msra.mxu0 0
  %822 = vmatprep.subr.bf16.mxu0 0
  %823 = vmatpush1.bf16.msra.mxu0 0
  %824 = vmatprep.subr.bf16.mxu0 0
  %825 = vmatpush1.bf16.msra.mxu0 0
  %826 = vmatprep.subr.bf16.mxu0 0
  %827 = vmatpush1.bf16.msra.mxu0 0
  %828 = vmatprep.subr.bf16.mxu0 0
  %829 = vmatpush1.bf16.msra.mxu0 0
  %830 = vmatprep.subr.bf16.mxu0 0
  %831 = vmatpush1.bf16.msra.mxu0 0
  %832 = vmatprep.subr.bf16.mxu0 0
  %833 = vmatpush1.bf16.msra.mxu0 0
  %834 = vmatprep.mubr.bf16.mxu0 0
  %835 = vmatmul.mubr.bf16.gmra.mrb[0].mxu0 %v800
  %v836 = vpop.f32.mrb[0].mxu0
  %v837 = vadd.f32 0.0, %v836
  %v838 = vpop.f32.mrb[0].mxu0
  %v839 = vpop.f32.mrb[0].mxu0
  %v840 = vpop.f32.mrb[0].mxu0
  %841 = vdwg.mxu0
  %v842 = vadd.f32 %v100, %v837
  %v843 = vxor.u32 %v842, 2147483648
  %v844 = vmul.f32 %v843, 1.442695
  %v845 = vpow.pop %v844
  %v846 = vadd.f32 %v845, 1.0
  %v847 = vrcp.pop %v846
  %v848 = vmul.f32 1.0, %v847
  %v849 = vtanh.pop %v842
  %v851 = vrot.slane %v779, 7
  %v853 = vmul.f32 %v848, %v851
  %855 = vrot.lane.b32.xlu0 %v849, 64
  %v856 = vpop.permute.xlu0 %855
  %v858 = vmul.f32 %v848, %v856
  %860 = vrot.lane.b32.xlu0 %v858, 32
  %v861 = vpop.permute.xlu0 %860
  %v863 = vadd.f32 %v853, %v861
  %v864 = vtanh.pop %v863
  %866 = vrot.lane.b32.xlu0 %v864, 64
  %v867 = vpop.permute.xlu0 %866
  %v869 = vmul.f32 %v848, %v867
  %871 = vrot.lane.b32.xlu0 %v869, 32
  %v872 = vpop.permute.xlu0 %871
  %874 = vst.msk [vmem:[#allocation2 + $0x8] sm:$0x1] %vm191, %v872
  %v875 = vpack.c.bf16 %v869, %v869
  %877 = vrot.lane.b32.xlu0 %v875, 32
  %v878 = vpop.permute.xlu0 %877
  %v880 = vsel %vm58, %v878, 0
  %882 = vmatprep.subr.bf16.mxu0 0
  %883 = vmatpush1.bf16.msra.mxu0 %v115
  %884 = vmatprep.subr.bf16.mxu0 0
  %885 = vmatpush1.bf16.msra.mxu0 %v116
  %886 = vmatprep.subr.bf16.mxu0 0
  %887 = vmatpush1.bf16.msra.mxu0 0
  %888 = vmatprep.subr.bf16.mxu0 0
  %889 = vmatpush1.bf16.msra.mxu0 0
  %890 = vmatprep.subr.bf16.mxu0 0
  %891 = vmatpush1.bf16.msra.mxu0 0
  %892 = vmatprep.subr.bf16.mxu0 0
  %893 = vmatpush1.bf16.msra.mxu0 0
  %894 = vmatprep.subr.bf16.mxu0 0
  %895 = vmatpush1.bf16.msra.mxu0 0
  %896 = vmatprep.subr.bf16.mxu0 0
  %897 = vmatpush1.bf16.msra.mxu0 0
  %898 = vmatprep.subr.bf16.mxu0 0
  %899 = vmatpush1.bf16.msra.mxu0 0
  %900 = vmatprep.subr.bf16.mxu0 0
  %901 = vmatpush1.bf16.msra.mxu0 0
  %902 = vmatprep.subr.bf16.mxu0 0
  %903 = vmatpush1.bf16.msra.mxu0 0
  %904 = vmatprep.subr.bf16.mxu0 0
  %905 = vmatpush1.bf16.msra.mxu0 0
  %906 = vmatprep.subr.bf16.mxu0 0
  %907 = vmatpush1.bf16.msra.mxu0 0
  %908 = vmatprep.subr.bf16.mxu0 0
  %909 = vmatpush1.bf16.msra.mxu0 0
  %910 = vmatprep.subr.bf16.mxu0 0
  %911 = vmatpush1.bf16.msra.mxu0 0
  %912 = vmatprep.subr.bf16.mxu0 0
  %913 = vmatpush1.bf16.msra.mxu0 0
  %914 = vmatprep.mubr.bf16.mxu0 0
  %915 = vmatmul.mubr.bf16.gmra.mrb[0].mxu0 %v880
  %v916 = vpop.f32.mrb[0].mxu0
  %v917 = vadd.f32 0.0, %v916
  %v918 = vpop.f32.mrb[0].mxu0
  %v919 = vpop.f32.mrb[0].mxu0
  %v920 = vpop.f32.mrb[0].mxu0
  %921 = vdwg.mxu0
  %v923 = vrot.slane %v917, 7
  %v925 = vadd.f32 %v100, %v923
  %v926 = vxor.u32 %v925, 2147483648
  %v927 = vmul.f32 %v926, 1.442695
  %v928 = vpow.pop %v927
  %v929 = vadd.f32 %v928, 1.0
  %v930 = vrcp.pop %v929
  %v931 = vmul.f32 1.0, %v930
  %v932 = vtanh.pop %v925
  %v934 = vrot.slane %v863, 7
  %v936 = vmul.f32 %v931, %v934
  %938 = vrot.lane.b32.xlu0 %v932, 64
  %v939 = vpop.permute.xlu0 %938
  %v941 = vmul.f32 %v931, %v939
  %943 = vrot.lane.b32.xlu0 %v941, 32
  %v944 = vpop.permute.xlu0 %943
  %v946 = vadd.f32 %v936, %v944
  %v947 = vtanh.pop %v946
  %949 = vrot.lane.b32.xlu0 %v947, 64
  %v950 = vpop.permute.xlu0 %949
  %v952 = vmul.f32 %v931, %v950
  %954 = vrot.lane.b32.xlu0 %v952, 32
  %v955 = vpop.permute.xlu0 %954
  %957 = vst.msk [vmem:[#allocation2 + $0x8] sm:$0x2] %vm275, %v955
  %v958 = vpack.c.bf16 %v952, %v952
  %v960 = vshrl.u32 %v958, 16
  %962 = vrot.lane.b32.xlu0 %v960, 32
  %v963 = vpop.permute.xlu0 %962
  %v965 = vsel %vm58, %v963, 0
  %967 = vmatprep.subr.bf16.mxu0 0
  %968 = vmatpush1.bf16.msra.mxu0 %v115
  %969 = vmatprep.subr.bf16.mxu0 0
  %970 = vmatpush1.bf16.msra.mxu0 %v116
  %971 = vmatprep.subr.bf16.mxu0 0
  %972 = vmatpush1.bf16.msra.mxu0 0
  %973 = vmatprep.subr.bf16.mxu0 0
  %974 = vmatpush1.bf16.msra.mxu0 0
  %975 = vmatprep.subr.bf16.mxu0 0
  %976 = vmatpush1.bf16.msra.mxu0 0
  %977 = vmatprep.subr.bf16.mxu0 0
  %978 = vmatpush1.bf16.msra.mxu0 0
  %979 = vmatprep.subr.bf16.mxu0 0
  %980 = vmatpush1.bf16.msra.mxu0 0
  %981 = vmatprep.subr.bf16.mxu0 0
  %982 = vmatpush1.bf16.msra.mxu0 0
  %983 = vmatprep.subr.bf16.mxu0 0
  %984 = vmatpush1.bf16.msra.mxu0 0
  %985 = vmatprep.subr.bf16.mxu0 0
  %986 = vmatpush1.bf16.msra.mxu0 0
  %987 = vmatprep.subr.bf16.mxu0 0
  %988 = vmatpush1.bf16.msra.mxu0 0
  %989 = vmatprep.subr.bf16.mxu0 0
  %990 = vmatpush1.bf16.msra.mxu0 0
  %991 = vmatprep.subr.bf16.mxu0 0
  %992 = vmatpush1.bf16.msra.mxu0 0
  %993 = vmatprep.subr.bf16.mxu0 0
  %994 = vmatpush1.bf16.msra.mxu0 0
  %995 = vmatprep.subr.bf16.mxu0 0
  %996 = vmatpush1.bf16.msra.mxu0 0
  %997 = vmatprep.subr.bf16.mxu0 0
  %998 = vmatpush1.bf16.msra.mxu0 0
  %999 = vmatprep.mubr.bf16.mxu0 0
  %1000 = vmatmul.mubr.bf16.gmra.mrb[0].mxu0 %v965
  %v1001 = vpop.f32.mrb[0].mxu0
  %v1002 = vadd.f32 0.0, %v1001
  %v1003 = vpop.f32.mrb[0].mxu0
  %v1004 = vpop.f32.mrb[0].mxu0
  %v1005 = vpop.f32.mrb[0].mxu0
  %1006 = vdwg.mxu0
  %v1008 = vrot.slane %v1002, 6
  %v1010 = vadd.f32 %v100, %v1008
  %v1011 = vxor.u32 %v1010, 2147483648
  %v1012 = vmul.f32 %v1011, 1.442695
  %v1013 = vpow.pop %v1012
  %v1014 = vadd.f32 %v1013, 1.0
  %v1015 = vrcp.pop %v1014
  %v1016 = vmul.f32 1.0, %v1015
  %v1017 = vtanh.pop %v1010
  %v1019 = vrot.slane %v946, 7
  %v1021 = vmul.f32 %v1016, %v1019
  %1023 = vrot.lane.b32.xlu0 %v1017, 64
  %v1024 = vpop.permute.xlu0 %1023
  %v1026 = vmul.f32 %v1016, %v1024
  %1028 = vrot.lane.b32.xlu0 %v1026, 32
  %v1029 = vpop.permute.xlu0 %1028
  %v1031 = vadd.f32 %v1021, %v1029
  %v1032 = vtanh.pop %v1031
  %1034 = vrot.lane.b32.xlu0 %v1032, 64
  %v1035 = vpop.permute.xlu0 %1034
  %v1037 = vmul.f32 %v1016, %v1035
  %1039 = vrot.lane.b32.xlu0 %v1037, 32
  %v1040 = vpop.permute.xlu0 %1039
  %1042 = vst.msk [vmem:[#allocation2 + $0x8] sm:$0x4] %vm361, %v1040
  %v1043 = vpack.c.bf16 %v1037, %v1037
  %v1045 = vrot.slane %v1043, 1
  %1046 = vrot.lane.b32.xlu0 %v1045, 32
  %v1047 = vpop.permute.xlu0 %1046
  %v1049 = vsel %vm58, %v1047, 0
  %1051 = vmatprep.subr.bf16.mxu0 0
  %1052 = vmatpush1.bf16.msra.mxu0 %v115
  %1053 = vmatprep.subr.bf16.mxu0 0
  %1054 = vmatpush1.bf16.msra.mxu0 %v116
  %1055 = vmatprep.subr.bf16.mxu0 0
  %1056 = vmatpush1.bf16.msra.mxu0 0
  %1057 = vmatprep.subr.bf16.mxu0 0
  %1058 = vmatpush1.bf16.msra.mxu0 0
  %1059 = vmatprep.subr.bf16.mxu0 0
  %1060 = vmatpush1.bf16.msra.mxu0 0
  %1061 = vmatprep.subr.bf16.mxu0 0
  %1062 = vmatpush1.bf16.msra.mxu0 0
  %1063 = vmatprep.subr.bf16.mxu0 0
  %1064 = vmatpush1.bf16.msra.mxu0 0
  %1065 = vmatprep.subr.bf16.mxu0 0
  %1066 = vmatpush1.bf16.msra.mxu0 0
  %1067 = vmatprep.subr.bf16.mxu0 0
  %1068 = vmatpush1.bf16.msra.mxu0 0
  %1069 = vmatprep.subr.bf16.mxu0 0
  %1070 = vmatpush1.bf16.msra.mxu0 0
  %1071 = vmatprep.subr.bf16.mxu0 0
  %1072 = vmatpush1.bf16.msra.mxu0 0
  %1073 = vmatprep.subr.bf16.mxu0 0
  %1074 = vmatpush1.bf16.msra.mxu0 0
  %1075 = vmatprep.subr.bf16.mxu0 0
  %1076 = vmatpush1.bf16.msra.mxu0 0
  %1077 = vmatprep.subr.bf16.mxu0 0
  %1078 = vmatpush1.bf16.msra.mxu0 0
  %1079 = vmatprep.subr.bf16.mxu0 0
  %1080 = vmatpush1.bf16.msra.mxu0 0
  %1081 = vmatprep.subr.bf16.mxu0 0
  %1082 = vmatpush1.bf16.msra.mxu0 0
  %1083 = vmatprep.mubr.bf16.mxu0 0
  %1084 = vmatmul.mubr.bf16.gmra.mrb[0].mxu0 %v1049
  %v1085 = vpop.f32.mrb[0].mxu0
  %v1086 = vadd.f32 0.0, %v1085
  %v1087 = vpop.f32.mrb[0].mxu0
  %v1088 = vpop.f32.mrb[0].mxu0
  %v1089 = vpop.f32.mrb[0].mxu0
  %1090 = vdwg.mxu0
  %v1092 = vrot.slane %v1086, 5
  %v1094 = vadd.f32 %v100, %v1092
  %v1095 = vxor.u32 %v1094, 2147483648
  %v1096 = vmul.f32 %v1095, 1.442695
  %v1097 = vpow.pop %v1096
  %v1098 = vadd.f32 %v1097, 1.0
  %v1099 = vrcp.pop %v1098
  %v1100 = vmul.f32 1.0, %v1099
  %v1101 = vtanh.pop %v1094
  %v1103 = vrot.slane %v1031, 7
  %v1105 = vmul.f32 %v1100, %v1103
  %1107 = vrot.lane.b32.xlu0 %v1101, 64
  %v1108 = vpop.permute.xlu0 %1107
  %v1110 = vmul.f32 %v1100, %v1108
  %1112 = vrot.lane.b32.xlu0 %v1110, 32
  %v1113 = vpop.permute.xlu0 %1112
  %v1115 = vadd.f32 %v1105, %v1113
  %v1116 = vtanh.pop %v1115
  %1118 = vrot.lane.b32.xlu0 %v1116, 64
  %v1119 = vpop.permute.xlu0 %1118
  %v1121 = vmul.f32 %v1100, %v1119
  %1123 = vrot.lane.b32.xlu0 %v1121, 32
  %v1124 = vpop.permute.xlu0 %1123
  %1126 = vst.msk [vmem:[#allocation2 + $0x8] sm:$0x8] %vm446, %v1124
  %v1127 = vpack.c.bf16 %v1121, %v1121
  %v1129 = vshrl.u32 %v1127, 16
  %v1131 = vrot.slane %v1129, 1
  %1132 = vrot.lane.b32.xlu0 %v1131, 32
  %v1133 = vpop.permute.xlu0 %1132
  %v1135 = vsel %vm58, %v1133, 0
  %1137 = vmatprep.subr.bf16.mxu0 0
  %1138 = vmatpush1.bf16.msra.mxu0 %v115
  %1139 = vmatprep.subr.bf16.mxu0 0
  %1140 = vmatpush1.bf16.msra.mxu0 %v116
  %1141 = vmatprep.subr.bf16.mxu0 0
  %1142 = vmatpush1.bf16.msra.mxu0 0
  %1143 = vmatprep.subr.bf16.mxu0 0
  %1144 = vmatpush1.bf16.msra.mxu0 0
  %1145 = vmatprep.subr.bf16.mxu0 0
  %1146 = vmatpush1.bf16.msra.mxu0 0
  %1147 = vmatprep.subr.bf16.mxu0 0
  %1148 = vmatpush1.bf16.msra.mxu0 0
  %1149 = vmatprep.subr.bf16.mxu0 0
  %1150 = vmatpush1.bf16.msra.mxu0 0
  %1151 = vmatprep.subr.bf16.mxu0 0
  %1152 = vmatpush1.bf16.msra.mxu0 0
  %1153 = vmatprep.subr.bf16.mxu0 0
  %1154 = vmatpush1.bf16.msra.mxu0 0
  %1155 = vmatprep.subr.bf16.mxu0 0
  %1156 = vmatpush1.bf16.msra.mxu0 0
  %1157 = vmatprep.subr.bf16.mxu0 0
  %1158 = vmatpush1.bf16.msra.mxu0 0
  %1159 = vmatprep.subr.bf16.mxu0 0
  %1160 = vmatpush1.bf16.msra.mxu0 0
  %1161 = vmatprep.subr.bf16.mxu0 0
  %1162 = vmatpush1.bf16.msra.mxu0 0
  %1163 = vmatprep.subr.bf16.mxu0 0
  %1164 = vmatpush1.bf16.msra.mxu0 0
  %1165 = vmatprep.subr.bf16.mxu0 0
  %1166 = vmatpush1.bf16.msra.mxu0 0
  %1167 = vmatprep.subr.bf16.mxu0 0
  %1168 = vmatpush1.bf16.msra.mxu0 0
  %1169 = vmatprep.mubr.bf16.mxu0 0
  %1170 = vmatmul.mubr.bf16.gmra.mrb[0].mxu0 %v1135
  %v1171 = vpop.f32.mrb[0].mxu0
  %v1172 = vadd.f32 0.0, %v1171
  %v1173 = vpop.f32.mrb[0].mxu0
  %v1174 = vpop.f32.mrb[0].mxu0
  %v1175 = vpop.f32.mrb[0].mxu0
  %1176 = vdwg.mxu0
  %v1178 = vrot.slane %v1172, 4
  %v1180 = vadd.f32 %v100, %v1178
  %v1181 = vxor.u32 %v1180, 2147483648
  %v1182 = vmul.f32 %v1181, 1.442695
  %v1183 = vpow.pop %v1182
  %v1184 = vadd.f32 %v1183, 1.0
  %v1185 = vrcp.pop %v1184
  %v1186 = vmul.f32 1.0, %v1185
  %v1187 = vtanh.pop %v1180
  %v1189 = vrot.slane %v1115, 7
  %v1191 = vmul.f32 %v1186, %v1189
  %1193 = vrot.lane.b32.xlu0 %v1187, 64
  %v1194 = vpop.permute.xlu0 %1193
  %v1196 = vmul.f32 %v1186, %v1194
  %1198 = vrot.lane.b32.xlu0 %v1196, 32
  %v1199 = vpop.permute.xlu0 %1198
  %v1201 = vadd.f32 %v1191, %v1199
  %v1202 = vtanh.pop %v1201
  %1204 = vrot.lane.b32.xlu0 %v1202, 64
  %v1205 = vpop.permute.xlu0 %1204
  %v1207 = vmul.f32 %v1186, %v1205
  %1209 = vrot.lane.b32.xlu0 %v1207, 32
  %v1210 = vpop.permute.xlu0 %1209
  %1212 = vst.msk [vmem:[#allocation2 + $0x8] sm:$0x10] %vm533, %v1210
  %v1213 = vpack.c.bf16 %v1207, %v1207
  %v1215 = vrot.slane %v1213, 2
  %1216 = vrot.lane.b32.xlu0 %v1215, 32
  %v1217 = vpop.permute.xlu0 %1216
  %v1219 = vsel %vm58, %v1217, 0
  %1221 = vmatprep.subr.bf16.mxu0 0
  %1222 = vmatpush1.bf16.msra.mxu0 %v115
  %1223 = vmatprep.subr.bf16.mxu0 0
  %1224 = vmatpush1.bf16.msra.mxu0 %v116
  %1225 = vmatprep.subr.bf16.mxu0 0
  %1226 = vmatpush1.bf16.msra.mxu0 0
  %1227 = vmatprep.subr.bf16.mxu0 0
  %1228 = vmatpush1.bf16.msra.mxu0 0
  %1229 = vmatprep.subr.bf16.mxu0 0
  %1230 = vmatpush1.bf16.msra.mxu0 0
  %1231 = vmatprep.subr.bf16.mxu0 0
  %1232 = vmatpush1.bf16.msra.mxu0 0
  %1233 = vmatprep.subr.bf16.mxu0 0
  %1234 = vmatpush1.bf16.msra.mxu0 0
  %1235 = vmatprep.subr.bf16.mxu0 0
  %1236 = vmatpush1.bf16.msra.mxu0 0
  %1237 = vmatprep.subr.bf16.mxu0 0
  %1238 = vmatpush1.bf16.msra.mxu0 0
  %1239 = vmatprep.subr.bf16.mxu0 0
  %1240 = vmatpush1.bf16.msra.mxu0 0
  %1241 = vmatprep.subr.bf16.mxu0 0
  %1242 = vmatpush1.bf16.msra.mxu0 0
  %1243 = vmatprep.subr.bf16.mxu0 0
  %1244 = vmatpush1.bf16.msra.mxu0 0
  %1245 = vmatprep.subr.bf16.mxu0 0
  %1246 = vmatpush1.bf16.msra.mxu0 0
  %1247 = vmatprep.subr.bf16.mxu0 0
  %1248 = vmatpush1.bf16.msra.mxu0 0
  %1249 = vmatprep.subr.bf16.mxu0 0
  %1250 = vmatpush1.bf16.msra.mxu0 0
  %1251 = vmatprep.subr.bf16.mxu0 0
  %1252 = vmatpush1.bf16.msra.mxu0 0
  %1253 = vmatprep.mubr.bf16.mxu0 0
  %1254 = vmatmul.mubr.bf16.gmra.mrb[0].mxu0 %v1219
  %v1255 = vpop.f32.mrb[0].mxu0
  %v1256 = vadd.f32 0.0, %v1255
  %v1257 = vpop.f32.mrb[0].mxu0
  %v1258 = vpop.f32.mrb[0].mxu0
  %v1259 = vpop.f32.mrb[0].mxu0
  %1260 = vdwg.mxu0
  %v1262 = vrot.slane %v1256, 3
  %v1264 = vadd.f32 %v100, %v1262
  %v1265 = vxor.u32 %v1264, 2147483648
  %v1266 = vmul.f32 %v1265, 1.442695
  %v1267 = vpow.pop %v1266
  %v1268 = vadd.f32 %v1267, 1.0
  %v1269 = vrcp.pop %v1268
  %v1270 = vmul.f32 1.0, %v1269
  %v1271 = vtanh.pop %v1264
  %v1273 = vrot.slane %v1201, 7
  %v1275 = vmul.f32 %v1270, %v1273
  %1277 = vrot.lane.b32.xlu0 %v1271, 64
  %v1278 = vpop.permute.xlu0 %1277
  %v1280 = vmul.f32 %v1270, %v1278
  %1282 = vrot.lane.b32.xlu0 %v1280, 32
  %v1283 = vpop.permute.xlu0 %1282
  %v1285 = vadd.f32 %v1275, %v1283
  %v1286 = vtanh.pop %v1285
  %1288 = vrot.lane.b32.xlu0 %v1286, 64
  %v1289 = vpop.permute.xlu0 %1288
  %v1291 = vmul.f32 %v1270, %v1289
  %1293 = vrot.lane.b32.xlu0 %v1291, 32
  %v1294 = vpop.permute.xlu0 %1293
  %1296 = vst.msk [vmem:[#allocation2 + $0x8] sm:$0x20] %vm618, %v1294
  %v1297 = vpack.c.bf16 %v1291, %v1291
  %v1299 = vshrl.u32 %v1297, 16
  %v1301 = vrot.slane %v1299, 2
  %1302 = vrot.lane.b32.xlu0 %v1301, 32
  %v1303 = vpop.permute.xlu0 %1302
  %v1305 = vsel %vm58, %v1303, 0
  %1307 = vmatprep.subr.bf16.mxu0 0
  %1308 = vmatpush1.bf16.msra.mxu0 %v115
  %1309 = vmatprep.subr.bf16.mxu0 0
  %1310 = vmatpush1.bf16.msra.mxu0 %v116
  %1311 = vmatprep.subr.bf16.mxu0 0
  %1312 = vmatpush1.bf16.msra.mxu0 0
  %1313 = vmatprep.subr.bf16.mxu0 0
  %1314 = vmatpush1.bf16.msra.mxu0 0
  %1315 = vmatprep.subr.bf16.mxu0 0
  %1316 = vmatpush1.bf16.msra.mxu0 0
  %1317 = vmatprep.subr.bf16.mxu0 0
  %1318 = vmatpush1.bf16.msra.mxu0 0
  %1319 = vmatprep.subr.bf16.mxu0 0
  %1320 = vmatpush1.bf16.msra.mxu0 0
  %1321 = vmatprep.subr.bf16.mxu0 0
  %1322 = vmatpush1.bf16.msra.mxu0 0
  %1323 = vmatprep.subr.bf16.mxu0 0
  %1324 = vmatpush1.bf16.msra.mxu0 0
  %1325 = vmatprep.subr.bf16.mxu0 0
  %1326 = vmatpush1.bf16.msra.mxu0 0
  %1327 = vmatprep.subr.bf16.mxu0 0
  %1328 = vmatpush1.bf16.msra.mxu0 0
  %1329 = vmatprep.subr.bf16.mxu0 0
  %1330 = vmatpush1.bf16.msra.mxu0 0
  %1331 = vmatprep.subr.bf16.mxu0 0
  %1332 = vmatpush1.bf16.msra.mxu0 0
  %1333 = vmatprep.subr.bf16.mxu0 0
  %1334 = vmatpush1.bf16.msra.mxu0 0
  %1335 = vmatprep.subr.bf16.mxu0 0
  %1336 = vmatpush1.bf16.msra.mxu0 0
  %1337 = vmatprep.subr.bf16.mxu0 0
  %1338 = vmatpush1.bf16.msra.mxu0 0
  %1339 = vmatprep.mubr.bf16.mxu0 0
  %1340 = vmatmul.mubr.bf16.gmra.mrb[0].mxu0 %v1305
  %v1341 = vpop.f32.mrb[0].mxu0
  %v1342 = vadd.f32 0.0, %v1341
  %v1343 = vpop.f32.mrb[0].mxu0
  %v1344 = vpop.f32.mrb[0].mxu0
  %v1345 = vpop.f32.mrb[0].mxu0
  %1346 = vdwg.mxu0
  %v1348 = vrot.slane %v1342, 2
  %v1350 = vadd.f32 %v100, %v1348
  %v1351 = vxor.u32 %v1350, 2147483648
  %v1352 = vmul.f32 %v1351, 1.442695
  %v1353 = vpow.pop %v1352
  %v1354 = vadd.f32 %v1353, 1.0
  %v1355 = vrcp.pop %v1354
  %v1356 = vmul.f32 1.0, %v1355
  %v1357 = vtanh.pop %v1350
  %v1359 = vrot.slane %v1285, 7
  %v1361 = vmul.f32 %v1356, %v1359
  %1363 = vrot.lane.b32.xlu0 %v1357, 64
  %v1364 = vpop.permute.xlu0 %1363
  %v1366 = vmul.f32 %v1356, %v1364
  %1368 = vrot.lane.b32.xlu0 %v1366, 32
  %v1369 = vpop.permute.xlu0 %1368
  %v1371 = vadd.f32 %v1361, %v1369
  %v1372 = vtanh.pop %v1371
  %1374 = vrot.lane.b32.xlu0 %v1372, 64
  %v1375 = vpop.permute.xlu0 %1374
  %v1377 = vmul.f32 %v1356, %v1375
  %1379 = vrot.lane.b32.xlu0 %v1377, 32
  %v1380 = vpop.permute.xlu0 %1379
  %1382 = vst.msk [vmem:[#allocation2 + $0x8] sm:$0x40] %vm705, %v1380
  %v1383 = vpack.c.bf16 %v1377, %v1377
  %v1385 = vrot.slane %v1383, 3
  %1386 = vrot.lane.b32.xlu0 %v1385, 32
  %v1387 = vpop.permute.xlu0 %1386
  %v1389 = vsel %vm58, %v1387, 0
  %1391 = vmatprep.subr.bf16.mxu0 0
  %1392 = vmatpush1.bf16.msra.mxu0 %v115
  %1393 = vmatprep.subr.bf16.mxu0 0
  %1394 = vmatpush1.bf16.msra.mxu0 %v116
  %1395 = vmatprep.subr.bf16.mxu0 0
  %1396 = vmatpush1.bf16.msra.mxu0 0
  %1397 = vmatprep.subr.bf16.mxu0 0
  %1398 = vmatpush1.bf16.msra.mxu0 0
  %1399 = vmatprep.subr.bf16.mxu0 0
  %1400 = vmatpush1.bf16.msra.mxu0 0
  %1401 = vmatprep.subr.bf16.mxu0 0
  %1402 = vmatpush1.bf16.msra.mxu0 0
  %1403 = vmatprep.subr.bf16.mxu0 0
  %1404 = vmatpush1.bf16.msra.mxu0 0
  %1405 = vmatprep.subr.bf16.mxu0 0
  %1406 = vmatpush1.bf16.msra.mxu0 0
  %1407 = vmatprep.subr.bf16.mxu0 0
  %1408 = vmatpush1.bf16.msra.mxu0 0
  %1409 = vmatprep.subr.bf16.mxu0 0
  %1410 = vmatpush1.bf16.msra.mxu0 0
  %1411 = vmatprep.subr.bf16.mxu0 0
  %1412 = vmatpush1.bf16.msra.mxu0 0
  %1413 = vmatprep.subr.bf16.mxu0 0
  %1414 = vmatpush1.bf16.msra.mxu0 0
  %1415 = vmatprep.subr.bf16.mxu0 0
  %1416 = vmatpush1.bf16.msra.mxu0 0
  %1417 = vmatprep.subr.bf16.mxu0 0
  %1418 = vmatpush1.bf16.msra.mxu0 0
  %1419 = vmatprep.subr.bf16.mxu0 0
  %1420 = vmatpush1.bf16.msra.mxu0 0
  %1421 = vmatprep.subr.bf16.mxu0 0
  %1422 = vmatpush1.bf16.msra.mxu0 0
  %1423 = vmatprep.mubr.bf16.mxu0 0
  %1424 = vmatmul.mubr.bf16.gmra.mrb[0].mxu0 %v1389
  %v1425 = vpop.f32.mrb[0].mxu0
  %v1426 = vadd.f32 0.0, %v1425
  %v1427 = vpop.f32.mrb[0].mxu0
  %v1428 = vpop.f32.mrb[0].mxu0
  %v1429 = vpop.f32.mrb[0].mxu0
  %1430 = vdwg.mxu0
  %v1432 = vrot.slane %v1426, 1
  %v1434 = vadd.f32 %v100, %v1432
  %v1435 = vxor.u32 %v1434, 2147483648
  %v1436 = vmul.f32 %v1435, 1.442695
  %v1437 = vpow.pop %v1436
  %v1438 = vadd.f32 %v1437, 1.0
  %v1439 = vrcp.pop %v1438
  %v1440 = vmul.f32 1.0, %v1439
  %v1441 = vtanh.pop %v1434
  %v1443 = vrot.slane %v1371, 7
  %v1445 = vmul.f32 %v1440, %v1443
  %1447 = vrot.lane.b32.xlu0 %v1441, 64
  %v1448 = vpop.permute.xlu0 %1447
  %v1450 = vmul.f32 %v1440, %v1448
  %1452 = vrot.lane.b32.xlu0 %v1450, 32
  %v1453 = vpop.permute.xlu0 %1452
  %v1455 = vadd.f32 %v1445, %v1453
  %v1456 = vtanh.pop %v1455
  %1458 = vrot.lane.b32.xlu0 %v1456, 64
  %v1459 = vpop.permute.xlu0 %1458
  %v1461 = vmul.f32 %v1440, %v1459
  %1463 = vrot.lane.b32.xlu0 %v1461, 32
  %v1464 = vpop.permute.xlu0 %1463
  %1466 = vst.msk [vmem:[#allocation2 + $0x8] sm:$0x80] %vm790, %v1464
  %v1467 = vld [vmem:[#allocation2] sm:$0xff]
  %v1468 = vld [vmem:[#allocation2 + $0x8] sm:$0xff]
  %v1470 = vsel %vm58, %v1467, 0
  %v1473 = vsel %vm58, %v1468, 0
  %1475 = vmatprep.subr.mxu0 0.0
  %1476 = vmatpush1.xpose.msra.mxu0 %v1470
  %1477 = vmatprep.subr.mxu0 0.0
  %1478 = vmatpush1.xpose.msra.mxu0 %v1473
  %1479 = vmatprep.subr.mxu0 0.0
  %1480 = vmatpush1.xpose.msra.mxu0 0.0
  %1481 = vmatprep.subr.mxu0 0.0
  %1482 = vmatpush1.xpose.msra.mxu0 0.0
  %1483 = vmatprep.subr.mxu0 0.0
  %1484 = vmatpush1.xpose.msra.mxu0 0.0
  %1485 = vmatprep.subr.mxu0 0.0
  %1486 = vmatpush1.xpose.msra.mxu0 0.0
  %1487 = vmatprep.subr.mxu0 0.0
  %1488 = vmatpush1.xpose.msra.mxu0 0.0
  %1489 = vmatprep.subr.mxu0 0.0
  %1490 = vmatpush1.xpose.msra.mxu0 0.0
  %1491 = vmatprep.subr.mxu0 0.0
  %1492 = vmatpush1.xpose.msra.mxu0 0.0
  %1493 = vmatprep.subr.mxu0 0.0
  %1494 = vmatpush1.xpose.msra.mxu0 0.0
  %1495 = vmatprep.subr.mxu0 0.0
  %1496 = vmatpush1.xpose.msra.mxu0 0.0
  %1497 = vmatprep.subr.mxu0 0.0
  %1498 = vmatpush1.xpose.msra.mxu0 0.0
  %1499 = vmatprep.subr.mxu0 0.0
  %1500 = vmatpush1.xpose.msra.mxu0 0.0
  %1501 = vmatprep.subr.mxu0 0.0
  %1502 = vmatpush1.xpose.msra.mxu0 0.0
  %1503 = vmatprep.subr.mxu0 0.0
  %1504 = vmatpush1.xpose.msra.mxu0 0.0
  %1505 = vmatprep.subr.mxu0 0.0
  %1506 = vmatpush1.xpose.msra.mxu0 0.0
  %1507 = vmatprep.subr.mxu0 0.0
  %1508 = vmatpush1.xpose.msra.mxu0 0.0
  %1509 = vmatprep.subr.mxu0 0.0
  %1510 = vmatpush1.xpose.msra.mxu0 0.0
  %1511 = vmatprep.subr.mxu0 0.0
  %1512 = vmatpush1.xpose.msra.mxu0 0.0
  %1513 = vmatprep.subr.mxu0 0.0
  %1514 = vmatpush1.xpose.msra.mxu0 0.0
  %1515 = vmatprep.subr.mxu0 0.0
  %1516 = vmatpush1.xpose.msra.mxu0 0.0
  %1517 = vmatprep.subr.mxu0 0.0
  %1518 = vmatpush1.xpose.msra.mxu0 0.0
  %1519 = vmatprep.subr.mxu0 0.0
  %1520 = vmatpush1.xpose.msra.mxu0 0.0
  %1521 = vmatprep.subr.mxu0 0.0
  %1522 = vmatpush1.xpose.msra.mxu0 0.0
  %1523 = vmatprep.subr.mxu0 0.0
  %1524 = vmatpush1.xpose.msra.mxu0 0.0
  %1525 = vmatprep.subr.mxu0 0.0
  %1526 = vmatpush1.xpose.msra.mxu0 0.0
  %1527 = vmatprep.subr.mxu0 0.0
  %1528 = vmatpush1.xpose.msra.mxu0 0.0
  %1529 = vmatprep.subr.mxu0 0.0
  %1530 = vmatpush1.xpose.msra.mxu0 0.0
  %1531 = vmatprep.subr.mxu0 0.0
  %1532 = vmatpush1.xpose.msra.mxu0 0.0
  %1533 = vmatprep.subr.mxu0 0.0
  %1534 = vmatpush1.xpose.msra.mxu0 0.0
  %1535 = vmatprep.subr.mxu0 0.0
  %1536 = vmatpush1.xpose.msra.mxu0 0.0
  %1537 = vmatprep.subr.mxu0 0.0
  %1538 = vmatpush1.xpose.msra.mxu0 0.0
  %1539 = vmatprep.mubr.f32.mxu0 0.0
  %1540 = vmatmul.mubr.f32.gmra.mrb[0].mxu0 %v1470
  %v1541 = vpop.f32.mrb[0].mxu0
  %v1542 = vadd.f32 0.0, %v1541
  %v1543 = vpop.f32.mrb[0].mxu0
  %1544 = vmatprep.mubr.f32.mxu0 0.0
  %1545 = vmatmul.mubr.f32.gmra.mrb[0].mxu0 %v1473
  %v1546 = vpop.f32.mrb[0].mxu0
  %v1547 = vadd.f32 0.0, %v1546
  %v1548 = vpop.f32.mrb[0].mxu0
  %1549 = vdwg.mxu0
  %v1550 = vmul.f32 %v1542, %v1542
  %v1551 = vmul.f32 %v1547, %v1547
  %vm1552 = vcmask 130048
  %v1553 = vsel %vm1552, %v1550, 0.0
  %1554 = vadd.xlane.f32.xlu0 %v1553
  %v1555 = vpop.xlane.xlu0 %1554
  %v1556 = vsel %vm1552, %v1551, 0.0
  %1557 = vadd.xlane.f32.xlu0 %v1556
  %v1558 = vpop.xlane.xlu0 %1557
  %v1559 = vrsqrt.pop %v1555
  %v1560 = vmul.f32 %v1555, %v1559
  %vm1561 = vcmp.eq.f32.partialorder %v1555, inf
  %v1562 = vsel %vm1561, %v1555, %v1560
  %vm1563 = vcmp.eq.f32.partialorder %v1555, 0.0
  %v1564 = vand.u32 %v1555, 2147483648
  %v1565 = vsel %vm1563, %v1564, %v1562
  %v1566 = vrsqrt.pop %v1558
  %v1567 = vmul.f32 %v1558, %v1566
  %vm1568 = vcmp.eq.f32.partialorder %v1558, inf
  %v1569 = vsel %vm1568, %v1558, %v1567
  %vm1570 = vcmp.eq.f32.partialorder %v1558, 0.0
  %v1571 = vand.u32 %v1558, 2147483648
  %v1572 = vsel %vm1570, %v1571, %v1569
  %v1573 = vmax.f32 %v1565, 1e-12
  %v1574 = vmax.f32 %v1572, 1e-12
  %v1575 = vrcp.pop %v1573
  %v1576 = vmul.f32 %v1542, %v1575
  %v1577 = vrcp.pop %v1574
  %v1578 = vmul.f32 %v1547, %v1577
  %v1579 = vld [vmem:[%s4] sm:$0xff]
  %v1580 = vld [vmem:[%s4 + $0x8] sm:$0xff]
  %v1581 = vld [vmem:[%s4 + $0x10] sm:$0xff]
  %v1582 = vld [vmem:[%s4 + $0x18] sm:$0xff]
  %v1583 = vld [vmem:[%s5] sm:$0xff]
  %v1584 = vld [vmem:[%s5 + $0x8] sm:$0xff]
  %v1586 = vsel %vm1552, %v1576, 0
  %v1589 = vsel %vm1552, %v1578, 0
  %1591 = vmatprep.subr.mxu0 0.0
  %1592 = vmatpush1.msra.mxu0 %v1583
  %1593 = vmatprep.subr.mxu0 0.0
  %1594 = vmatpush1.msra.mxu0 %v1584
  %1595 = vmatprep.subr.mxu0 0.0
  %1596 = vmatpush1.msra.mxu0 0.0
  %1597 = vmatprep.subr.mxu0 0.0
  %1598 = vmatpush1.msra.mxu0 0.0
  %1599 = vmatprep.subr.mxu0 0.0
  %1600 = vmatpush1.msra.mxu0 0.0
  %1601 = vmatprep.subr.mxu0 0.0
  %1602 = vmatpush1.msra.mxu0 0.0
  %1603 = vmatprep.subr.mxu0 0.0
  %1604 = vmatpush1.msra.mxu0 0.0
  %1605 = vmatprep.subr.mxu0 0.0
  %1606 = vmatpush1.msra.mxu0 0.0
  %1607 = vmatprep.subr.mxu0 0.0
  %1608 = vmatpush1.msra.mxu0 0.0
  %1609 = vmatprep.subr.mxu0 0.0
  %1610 = vmatpush1.msra.mxu0 0.0
  %1611 = vmatprep.subr.mxu0 0.0
  %1612 = vmatpush1.msra.mxu0 0.0
  %1613 = vmatprep.subr.mxu0 0.0
  %1614 = vmatpush1.msra.mxu0 0.0
  %1615 = vmatprep.subr.mxu0 0.0
  %1616 = vmatpush1.msra.mxu0 0.0
  %1617 = vmatprep.subr.mxu0 0.0
  %1618 = vmatpush1.msra.mxu0 0.0
  %1619 = vmatprep.subr.mxu0 0.0
  %1620 = vmatpush1.msra.mxu0 0.0
  %1621 = vmatprep.subr.mxu0 0.0
  %1622 = vmatpush1.msra.mxu0 0.0
  %1623 = vmatprep.subr.mxu0 0.0
  %1624 = vmatpush1.msra.mxu0 0.0
  %1625 = vmatprep.subr.mxu0 0.0
  %1626 = vmatpush1.msra.mxu0 0.0
  %1627 = vmatprep.subr.mxu0 0.0
  %1628 = vmatpush1.msra.mxu0 0.0
  %1629 = vmatprep.subr.mxu0 0.0
  %1630 = vmatpush1.msra.mxu0 0.0
  %1631 = vmatprep.subr.mxu0 0.0
  %1632 = vmatpush1.msra.mxu0 0.0
  %1633 = vmatprep.subr.mxu0 0.0
  %1634 = vmatpush1.msra.mxu0 0.0
  %1635 = vmatprep.subr.mxu0 0.0
  %1636 = vmatpush1.msra.mxu0 0.0
  %1637 = vmatprep.subr.mxu0 0.0
  %1638 = vmatpush1.msra.mxu0 0.0
  %1639 = vmatprep.subr.mxu0 0.0
  %1640 = vmatpush1.msra.mxu0 0.0
  %1641 = vmatprep.subr.mxu0 0.0
  %1642 = vmatpush1.msra.mxu0 0.0
  %1643 = vmatprep.subr.mxu0 0.0
  %1644 = vmatpush1.msra.mxu0 0.0
  %1645 = vmatprep.subr.mxu0 0.0
  %1646 = vmatpush1.msra.mxu0 0.0
  %1647 = vmatprep.subr.mxu0 0.0
  %1648 = vmatpush1.msra.mxu0 0.0
  %1649 = vmatprep.subr.mxu0 0.0
  %1650 = vmatpush1.msra.mxu0 0.0
  %1651 = vmatprep.subr.mxu0 0.0
  %1652 = vmatpush1.msra.mxu0 0.0
  %1653 = vmatprep.subr.mxu0 0.0
  %1654 = vmatpush1.msra.mxu0 0.0
  %1655 = vmatprep.mubr.f32.mxu0 0.0
  %1656 = vmatmul.mubr.f32.gmra.mrb[0].mxu0 %v1586
  %v1657 = vpop.f32.mrb[0].mxu0
  %v1658 = vadd.f32 0.0, %v1657
  %v1659 = vpop.f32.mrb[0].mxu0
  %1660 = vmatprep.mubr.f32.mxu0 0.0
  %1661 = vmatmul.mubr.f32.gmra.mrb[0].mxu0 %v1589
  %v1662 = vpop.f32.mrb[0].mxu0
  %v1663 = vadd.f32 0.0, %v1662
  %v1664 = vpop.f32.mrb[0].mxu0
  %1665 = vdwg.mxu0
  %1666 = vmatprep.subr.mxu0 0.0
  %1667 = vmatpush1.msra.mxu0 %v1579
  %1668 = vmatprep.subr.mxu0 0.0
  %1669 = vmatpush1.msra.mxu0 %v1580
  %1670 = vmatprep.subr.mxu0 0.0
  %1671 = vmatpush1.msra.mxu0 %v1581
  %1672 = vmatprep.subr.mxu0 0.0
  %1673 = vmatpush1.msra.mxu0 %v1582
  %1674 = vmatprep.subr.mxu0 0.0
  %1675 = vmatpush1.msra.mxu0 0.0
  %1676 = vmatprep.subr.mxu0 0.0
  %1677 = vmatpush1.msra.mxu0 0.0
  %1678 = vmatprep.subr.mxu0 0.0
  %1679 = vmatpush1.msra.mxu0 0.0
  %1680 = vmatprep.subr.mxu0 0.0
  %1681 = vmatpush1.msra.mxu0 0.0
  %1682 = vmatprep.subr.mxu0 0.0
  %1683 = vmatpush1.msra.mxu0 0.0
  %1684 = vmatprep.subr.mxu0 0.0
  %1685 = vmatpush1.msra.mxu0 0.0
  %1686 = vmatprep.subr.mxu0 0.0
  %1687 = vmatpush1.msra.mxu0 0.0
  %1688 = vmatprep.subr.mxu0 0.0
  %1689 = vmatpush1.msra.mxu0 0.0
  %1690 = vmatprep.subr.mxu0 0.0
  %1691 = vmatpush1.msra.mxu0 0.0
  %1692 = vmatprep.subr.mxu0 0.0
  %1693 = vmatpush1.msra.mxu0 0.0
  %1694 = vmatprep.subr.mxu0 0.0
  %1695 = vmatpush1.msra.mxu0 0.0
  %1696 = vmatprep.subr.mxu0 0.0
  %1697 = vmatpush1.msra.mxu0 0.0
  %1698 = vmatprep.subr.mxu0 0.0
  %1699 = vmatpush1.msra.mxu0 0.0
  %1700 = vmatprep.subr.mxu0 0.0
  %1701 = vmatpush1.msra.mxu0 0.0
  %1702 = vmatprep.subr.mxu0 0.0
  %1703 = vmatpush1.msra.mxu0 0.0
  %1704 = vmatprep.subr.mxu0 0.0
  %1705 = vmatpush1.msra.mxu0 0.0
  %1706 = vmatprep.subr.mxu0 0.0
  %1707 = vmatpush1.msra.mxu0 0.0
  %1708 = vmatprep.subr.mxu0 0.0
  %1709 = vmatpush1.msra.mxu0 0.0
  %1710 = vmatprep.subr.mxu0 0.0
  %1711 = vmatpush1.msra.mxu0 0.0
  %1712 = vmatprep.subr.mxu0 0.0
  %1713 = vmatpush1.msra.mxu0 0.0
  %1714 = vmatprep.subr.mxu0 0.0
  %1715 = vmatpush1.msra.mxu0 0.0
  %1716 = vmatprep.subr.mxu0 0.0
  %1717 = vmatpush1.msra.mxu0 0.0
  %1718 = vmatprep.subr.mxu0 0.0
  %1719 = vmatpush1.msra.mxu0 0.0
  %1720 = vmatprep.subr.mxu0 0.0
  %1721 = vmatpush1.msra.mxu0 0.0
  %1722 = vmatprep.subr.mxu0 0.0
  %1723 = vmatpush1.msra.mxu0 0.0
  %1724 = vmatprep.subr.mxu0 0.0
  %1725 = vmatpush1.msra.mxu0 0.0
  %1726 = vmatprep.subr.mxu0 0.0
  %1727 = vmatpush1.msra.mxu0 0.0
  %1728 = vmatprep.subr.mxu0 0.0
  %1729 = vmatpush1.msra.mxu0 0.0
  %1730 = vmatprep.mubr.f32.mxu0 0.0
  %1731 = vmatmul.mubr.f32.gmra.mrb[0].mxu0 %v1470
  %v1732 = vpop.f32.mrb[0].mxu0
  %v1733 = vadd.f32 %v1658, %v1732
  %v1734 = vpop.f32.mrb[0].mxu0
  %1735 = vmatprep.mubr.f32.mxu0 0.0
  %1736 = vmatmul.mubr.f32.gmra.mrb[0].mxu0 %v1473
  %v1737 = vpop.f32.mrb[0].mxu0
  %v1738 = vadd.f32 %v1663, %v1737
  %v1739 = vpop.f32.mrb[0].mxu0
  %1740 = vdwg.mxu0
  %s1741 = sld [smem:[#allocation3]]
  %v1742 = vstv %s1741
  %v1743 = vadd.f32 %v1733, %v1742
  %v1744 = vadd.f32 %v1738, %v1742
  %vm1745 = vcmask 7168
  %1746 = vst.msk [vmem:[%s7] sm:$0xff] %vm1745, %v1743
  %1747 = vst.msk [vmem:[%s7 + $0x8] sm:$0xff] %vm1745, %v1744
  // Predicated region
  $region30: #{tpu_custom_call.1} parent=0 // pred_check
    _
  $region31: #{tpu_custom_call.1} parent=0 // pred_check_branch
    %1749 = sbr.rel (0) target = $region33
  $region32: #{tpu_custom_call.1} parent=0 // pred_region
    _
  $region33: #{tpu_custom_call.1} parent=0 // pred_fallthru
    _
  // Predicated region
  $region34: #{tpu_custom_call.1} parent=0 // pred_check
    _
  $region35: #{tpu_custom_call.1} parent=0 // pred_check_branch
    %1751 = sbr.rel (0) target = $region37
  $region36: #{tpu_custom_call.1} parent=0 // pred_region
    _
  $region37: #{tpu_custom_call.1} parent=0 // pred_fallthru
    _

</llo_original>
